<compile_context>
chip_gen: v5e
topology: v5e:2x2
jax: 0.10.0
libtpu: 0.0.40
codegen_flags: <defaults>
</compile_context>

<pallas_src>
import functools

import jax
import jax.numpy as jnp
from jax.experimental import pallas as pl
from jax.experimental.pallas import tpu as pltpu


def _attn_kernel(x_q_ref, x_ref, wqkv_ref, wout_ref, bout_ref, o_ref, acc_ref,
                 *, heads, dim_head):
    # x_q_ref  : (C, tq)        query columns of this batch element
    # x_ref    : (C, N)         all columns (keys / values)
    # wqkv_ref : (3*hidden, C)  1x1 conv weight (no bias)
    # wout_ref : (C, hidden)    1x1 conv weight
    # bout_ref : (C, 1)         1x1 conv bias
    # o_ref    : (C, tq)        output block
    # acc_ref  : (hidden, tq)   VMEM scratch, per-head results land in row slices
    hidden = heads * dim_head
    scale = dim_head ** (-0.5)

    # 1x1 convs == channel matmuls; spatial dim stays on the lane axis.
    x_q = x_q_ref[...].astype(jnp.bfloat16)                         # (C, tq)
    x_all = x_ref[...].astype(jnp.bfloat16)                         # (C, N)
    w_q = wqkv_ref[0:hidden, :].astype(jnp.bfloat16)                # (hidden, C)
    w_kv = wqkv_ref[hidden:3 * hidden, :].astype(jnp.bfloat16)      # (2*hidden, C)

    q_all = jnp.dot(w_q, x_q, preferred_element_type=jnp.float32)   # (hidden, tq) f32
    kv = jnp.dot(w_kv, x_all, preferred_element_type=jnp.float32)   # (2*hidden, N) f32

    # One small transpose so each head's Q feeds a standard (tq,dh)@(dh,N) matmul.
    q_t = (q_all * scale).T                                         # (tq, hidden) f32
    k_all = kv[0:hidden, :]                                         # (hidden, N) f32
    v_all = kv[hidden:2 * hidden, :]                                # (hidden, N) f32

    for h in range(heads):
        lo, hi = h * dim_head, (h + 1) * dim_head
        q_h = q_t[:, lo:hi]                                         # (tq, dh) f32
        k_h = k_all[lo:hi, :]                                       # (dh, N)  f32
        v_h = v_all[lo:hi, :].astype(jnp.bfloat16)                  # (dh, N)  bf16

        # sim[i, j] = sum_d q[i, d] * k[d, j]    (softmax over keys j, f32)
        s = jnp.dot(q_h, k_h, preferred_element_type=jnp.float32)   # (tq, N)
        s = s - jnp.max(s, axis=-1, keepdims=True)
        p = jnp.exp(s)
        l = jnp.sum(p, axis=-1, keepdims=True)                      # (tq, 1)
        attn = (p * pl.reciprocal(l, approx=True)).astype(jnp.bfloat16)

        # out_h[d, i] = sum_j attn[i, j] * v[d, j]  -> (dh, tq), lane-dense in queries
        o_h = jax.lax.dot_general(
            v_h, attn, (((1,), (1,)), ((), ())),
            preferred_element_type=jnp.float32)
        acc_ref[lo:hi, :] = o_h                                     # sublane row-slice write

    # to_out 1x1 conv with bias, still channels-x-tokens.
    out = acc_ref[...].astype(jnp.bfloat16)                         # (hidden, tq)
    w_o = wout_ref[...].astype(jnp.bfloat16)                        # (C, hidden)
    y = jnp.dot(w_o, out, preferred_element_type=jnp.float32) + bout_ref[...]
    o_ref[...] = y.astype(o_ref.dtype)


def self_attention_2d(x_nchw, w_qkv, w_out, b_out, *, heads, dim_head, q_tile=128):
    """x_nchw: (B, C, H, W) float32. Returns (B, C, H, W)."""
    B, C, H, W = x_nchw.shape
    N = H * W
    hidden = heads * dim_head
    assert w_qkv.shape == (3 * hidden, C)
    assert w_out.shape == (C, hidden)
    assert b_out.shape == (C,)

    tq = min(q_tile, N)
    assert N % tq == 0, "N must be divisible by the query tile"
    assert tq == N or tq % 128 == 0, "query tile must be lane-aligned"

    # NCHW -> (B, C, N): a free reshape (no transpose). Lane axis = spatial.
    x_flat = x_nchw.reshape(B, C, N)
    b_out2d = b_out.reshape(C, 1)

    kernel = functools.partial(_attn_kernel, heads=heads, dim_head=dim_head)

    y_flat = pl.pallas_call(
        kernel,
        out_shape=jax.ShapeDtypeStruct((B, C, N), x_nchw.dtype),
        grid_spec=pltpu.PrefetchScalarGridSpec(
            num_scalar_prefetch=0,
            grid=(B, N // tq),
            in_specs=[
                # query columns of x for this tile
                pl.BlockSpec((None, C, tq), lambda b, qi: (b, 0, qi)),
                # full x (keys / values) for this batch element
                pl.BlockSpec((None, C, N), lambda b, qi: (b, 0, 0)),
                pl.BlockSpec((3 * hidden, C), lambda b, qi: (0, 0)),
                pl.BlockSpec((C, hidden), lambda b, qi: (0, 0)),
                pl.BlockSpec((C, 1), lambda b, qi: (0, 0)),
            ],
            out_specs=pl.BlockSpec((None, C, tq), lambda b, qi: (b, 0, qi)),
            scratch_shapes=[pltpu.VMEM((hidden, tq), jnp.float32)],
        ),
        compiler_params=pltpu.CompilerParams(
            dimension_semantics=("parallel", "parallel"),
            # For large N / q_tile, set vmem_limit_bytes=... here (v7x has half
            # the VMEM of v5e/v6e; keep tq*N score blocks within budget).
        ),
    )(x_flat, x_flat, w_qkv, w_out, b_out2d)

    # (B, C, N) -> NCHW, free reshape.
    return y_flat.reshape(B, C, H, W)


def _reference(x_nchw, w_qkv, w_out, b_out, *, heads, dim_head):
    """Pure-JAX reference mirroring the PyTorch forward exactly (f32)."""
    B, C, H, W = x_nchw.shape
    N = H * W
    hidden = heads * dim_head
    scale = dim_head ** (-0.5)

    qkv = jnp.einsum('bchw,oc->bohw', x_nchw, w_qkv)
    q, k, v = jnp.split(qkv, 3, axis=1)

    def rearr(t):  # 'b (h c) x y -> b h c (x y)'
        return t.reshape(B, heads, dim_head, N)

    q, k, v = rearr(q) * scale, rearr(k), rearr(v)
    sim = jnp.einsum('bhdi,bhdj->bhij', q, k)
    sim = sim - jnp.max(sim, axis=-1, keepdims=True)
    attn = jax.nn.softmax(sim, axis=-1)
    out = jnp.einsum('bhij,bhdj->bhid', attn, v)           # (B, heads, N, dh)
    out = jnp.transpose(out, (0, 1, 3, 2)).reshape(B, hidden, H, W)
    y = jnp.einsum('bchw,oc->bohw', out, w_out) + b_out[None, :, None, None]
    return y


if __name__ == "__main__":
    B, DIM, H, W = 2, 4, 16, 16
    HEADS, DIM_HEAD = 4, 2
    HIDDEN = HEADS * DIM_HEAD

    key = jax.random.PRNGKey(0)
    kx, k1, k2, k3 = jax.random.split(key, 4)

    x = jax.random.normal(kx, (B, DIM, H, W), dtype=jnp.float32)
    # Deterministic synthetic parameters (shapes from the module __init__).
    w_qkv = jax.random.normal(k1, (3 * HIDDEN, DIM), dtype=jnp.float32) * 0.2
    w_out = jax.random.normal(k2, (DIM, HIDDEN), dtype=jnp.float32) * 0.2
    b_out = jax.random.normal(k3, (DIM,), dtype=jnp.float32) * 0.1

    y = self_attention_2d(x, w_qkv, w_out, b_out, heads=HEADS, dim_head=DIM_HEAD)
    y = jax.block_until_ready(y)

    y_ref = _reference(x, w_qkv, w_out, b_out, heads=HEADS, dim_head=DIM_HEAD)
    assert y.shape == (B, DIM, H, W)
    # bf16 MXU operands + approx reciprocal -> slightly relaxed tolerance.
    assert jnp.allclose(y, y_ref, atol=3e-2, rtol=3e-2), "mismatch vs reference"

    print("KERNEL_OK")
</pallas_src>

<mosaic_0001>
module attributes {stable_mosaic.version = 11 : i64} {
  func.func @_attn_kernel(%arg0: i32, %arg1: i32, %arg2: memref<1x4x128xf32, #tpu.memory_space<vmem>>, %arg3: memref<1x4x256xf32, #tpu.memory_space<vmem>>, %arg4: memref<24x4xf32, #tpu.memory_space<vmem>>, %arg5: memref<4x8xf32, #tpu.memory_space<vmem>>, %arg6: memref<4x1xf32, #tpu.memory_space<vmem>>, %arg7: memref<1x4x128xf32, #tpu.memory_space<vmem>>, %arg8: memref<8x128xf32, #tpu.memory_space<vmem>>) attributes {dimension_semantics = [#tpu.dimension_semantics<parallel>, #tpu.dimension_semantics<parallel>], iteration_bounds = array<i64: 2, 2>, scalar_prefetch = 0 : i64, scratch_operands = 1 : i64, tpu.core_type = #tpu.core_type<tc>, window_params = [{transform_indices = @transform_0, window_bounds = array<i64: 1, 4, 128>}, {transform_indices = @transform_1, window_bounds = array<i64: 1, 4, 256>}, {pipeline_mode = #tpu.pipeline_mode<synchronous>, transform_indices = @transform_2, window_bounds = array<i64: 24, 4>}, {pipeline_mode = #tpu.pipeline_mode<synchronous>, transform_indices = @transform_3, window_bounds = array<i64: 4, 8>}, {pipeline_mode = #tpu.pipeline_mode<synchronous>, transform_indices = @transform_4, window_bounds = array<i64: 4, 1>}, {transform_indices = @transform_5, window_bounds = array<i64: 1, 4, 128>}]} {
    %c0 = arith.constant 0 : index
    %c0_0 = arith.constant 0 : index
    %c0_1 = arith.constant 0 : index
    %0 = vector.load %arg2[%c0, %c0_0, %c0_1] : memref<1x4x128xf32, #tpu.memory_space<vmem>>, vector<1x4x128xf32>
    %1 = vector.shape_cast %0 : vector<1x4x128xf32> to vector<4x128xf32>
    %2 = arith.truncf %1 : vector<4x128xf32> to vector<4x128xbf16>
    %c0_2 = arith.constant 0 : index
    %c0_3 = arith.constant 0 : index
    %c0_4 = arith.constant 0 : index
    %3 = vector.load %arg3[%c0_2, %c0_3, %c0_4] : memref<1x4x256xf32, #tpu.memory_space<vmem>>, vector<1x4x256xf32>
    %4 = vector.shape_cast %3 : vector<1x4x256xf32> to vector<4x256xf32>
    %5 = arith.truncf %4 : vector<4x256xf32> to vector<4x256xbf16>
    %c0_5 = arith.constant 0 : index
    %c0_6 = arith.constant 0 : index
    %6 = vector.load %arg4[%c0_5, %c0_6] : memref<24x4xf32, #tpu.memory_space<vmem>>, vector<8x4xf32>
    %7 = arith.truncf %6 : vector<8x4xf32> to vector<8x4xbf16>
    %c8 = arith.constant 8 : index
    %c0_7 = arith.constant 0 : index
    %8 = vector.load %arg4[%c8, %c0_7] : memref<24x4xf32, #tpu.memory_space<vmem>>, vector<16x4xf32>
    %9 = arith.truncf %8 : vector<16x4xf32> to vector<16x4xbf16>
    %cst = arith.constant dense<0.000000e+00> : vector<8x128xf32>
    %10 = tpu.matmul %7, %2, %cst {dimension_numbers = #tpu.dot_dimension_numbers<[1], [0], [0], [1], [0, 0, 1, 1], [], []>} : vector<8x4xbf16>, vector<4x128xbf16>, vector<8x128xf32> -> vector<8x128xf32>
    %cst_8 = arith.constant dense<0.000000e+00> : vector<16x256xf32>
    %11 = tpu.matmul %9, %5, %cst_8 {dimension_numbers = #tpu.dot_dimension_numbers<[1], [0], [0], [1], [0, 0, 1, 1], [], []>} : vector<16x4xbf16>, vector<4x256xbf16>, vector<16x256xf32> -> vector<16x256xf32>
    %cst_9 = arith.constant 0.707106769 : f32
    %12 = vector.broadcast %cst_9 : f32 to vector<8x128xf32>
    %13 = arith.mulf %10, %12 : vector<8x128xf32>
    %14 = tpu.transpose %13, [1, 0] : vector<8x128xf32> -> vector<128x8xf32>
    %15 = vector.extract_strided_slice %11 {offsets = [0, 0], sizes = [8, 256], strides = [1, 1]} : vector<16x256xf32> to vector<8x256xf32>
    %16 = vector.extract_strided_slice %11 {offsets = [8, 0], sizes = [8, 256], strides = [1, 1]} : vector<16x256xf32> to vector<8x256xf32>
    %17 = vector.extract_strided_slice %14 {offsets = [0, 0], sizes = [128, 2], strides = [1, 1]} : vector<128x8xf32> to vector<128x2xf32>
    %18 = vector.extract_strided_slice %15 {offsets = [0, 0], sizes = [2, 256], strides = [1, 1]} : vector<8x256xf32> to vector<2x256xf32>
    %19 = vector.extract_strided_slice %16 {offsets = [0, 0], sizes = [2, 256], strides = [1, 1]} : vector<8x256xf32> to vector<2x256xf32>
    %20 = arith.truncf %19 : vector<2x256xf32> to vector<2x256xbf16>
    %cst_10 = arith.constant dense<0.000000e+00> : vector<128x256xf32>
    %21 = tpu.matmul %17, %18, %cst_10 {dimension_numbers = #tpu.dot_dimension_numbers<[1], [0], [0], [1], [0, 0, 1, 1], [], []>} : vector<128x2xf32>, vector<2x256xf32>, vector<128x256xf32> -> vector<128x256xf32>
    %cst_11 = arith.constant dense<0xFF800000> : vector<128xf32>
    %22 = vector.multi_reduction <maximumf>, %21, %cst_11 [1] : vector<128x256xf32> to vector<128xf32>
    %23 = vector.shape_cast %22 : vector<128xf32> to vector<128x1xf32>
    %24 = vector.broadcast %23 : vector<128x1xf32> to vector<128x256xf32>
    %25 = arith.subf %21, %24 : vector<128x256xf32>
    %26 = math.exp %25 : vector<128x256xf32>
    %cst_12 = arith.constant dense<0.000000e+00> : vector<128xf32>
    %27 = vector.multi_reduction <add>, %26, %cst_12 [1] : vector<128x256xf32> to vector<128xf32>
    %28 = vector.shape_cast %27 : vector<128xf32> to vector<128x1xf32>
    %29 = tpu.reciprocal %28 {approx = true} : vector<128x1xf32> -> vector<128x1xf32>
    %30 = vector.broadcast %29 : vector<128x1xf32> to vector<128x256xf32>
    %31 = arith.mulf %26, %30 : vector<128x256xf32>
    %32 = arith.truncf %31 : vector<128x256xf32> to vector<128x256xbf16>
    %cst_13 = arith.constant dense<0.000000e+00> : vector<2x128xf32>
    %33 = tpu.matmul %20, %32, %cst_13 {dimension_numbers = #tpu.dot_dimension_numbers<[1], [1], [0], [0], [0, 0, 1, 0], [], []>} : vector<2x256xbf16>, vector<128x256xbf16>, vector<2x128xf32> -> vector<2x128xf32>
    %c0_14 = arith.constant 0 : index
    %c0_15 = arith.constant 0 : index
    %34 = vector.load %arg8[%c0_14, %c0_15] : memref<8x128xf32, #tpu.memory_space<vmem>>, vector<2x128xf32>
    tpu.vector_store %arg8[%c0_14, %c0_15], %33 {strides = array<i32>} : memref<8x128xf32, #tpu.memory_space<vmem>>, vector<2x128xf32>,
    %35 = vector.extract_strided_slice %14 {offsets = [0, 2], sizes = [128, 2], strides = [1, 1]} : vector<128x8xf32> to vector<128x2xf32>
    %36 = vector.extract_strided_slice %15 {offsets = [2, 0], sizes = [2, 256], strides = [1, 1]} : vector<8x256xf32> to vector<2x256xf32>
    %37 = vector.extract_strided_slice %16 {offsets = [2, 0], sizes = [2, 256], strides = [1, 1]} : vector<8x256xf32> to vector<2x256xf32>
    %38 = arith.truncf %37 : vector<2x256xf32> to vector<2x256xbf16>
    %cst_16 = arith.constant dense<0.000000e+00> : vector<128x256xf32>
    %39 = tpu.matmul %35, %36, %cst_16 {dimension_numbers = #tpu.dot_dimension_numbers<[1], [0], [0], [1], [0, 0, 1, 1], [], []>} : vector<128x2xf32>, vector<2x256xf32>, vector<128x256xf32> -> vector<128x256xf32>
    %cst_17 = arith.constant dense<0xFF800000> : vector<128xf32>
    %40 = vector.multi_reduction <maximumf>, %39, %cst_17 [1] : vector<128x256xf32> to vector<128xf32>
    %41 = vector.shape_cast %40 : vector<128xf32> to vector<128x1xf32>
    %42 = vector.broadcast %41 : vector<128x1xf32> to vector<128x256xf32>
    %43 = arith.subf %39, %42 : vector<128x256xf32>
    %44 = math.exp %43 : vector<128x256xf32>
    %cst_18 = arith.constant dense<0.000000e+00> : vector<128xf32>
    %45 = vector.multi_reduction <add>, %44, %cst_18 [1] : vector<128x256xf32> to vector<128xf32>
    %46 = vector.shape_cast %45 : vector<128xf32> to vector<128x1xf32>
    %47 = tpu.reciprocal %46 {approx = true} : vector<128x1xf32> -> vector<128x1xf32>
    %48 = vector.broadcast %47 : vector<128x1xf32> to vector<128x256xf32>
    %49 = arith.mulf %44, %48 : vector<128x256xf32>
    %50 = arith.truncf %49 : vector<128x256xf32> to vector<128x256xbf16>
    %cst_19 = arith.constant dense<0.000000e+00> : vector<2x128xf32>
    %51 = tpu.matmul %38, %50, %cst_19 {dimension_numbers = #tpu.dot_dimension_numbers<[1], [1], [0], [0], [0, 0, 1, 0], [], []>} : vector<2x256xbf16>, vector<128x256xbf16>, vector<2x128xf32> -> vector<2x128xf32>
    %c2 = arith.constant 2 : index
    %c0_20 = arith.constant 0 : index
    %52 = vector.load %arg8[%c2, %c0_20] : memref<8x128xf32, #tpu.memory_space<vmem>>, vector<2x128xf32>
    tpu.vector_store %arg8[%c2, %c0_20], %51 {strides = array<i32>} : memref<8x128xf32, #tpu.memory_space<vmem>>, vector<2x128xf32>,
    %53 = vector.extract_strided_slice %14 {offsets = [0, 4], sizes = [128, 2], strides = [1, 1]} : vector<128x8xf32> to vector<128x2xf32>
    %54 = vector.extract_strided_slice %15 {offsets = [4, 0], sizes = [2, 256], strides = [1, 1]} : vector<8x256xf32> to vector<2x256xf32>
    %55 = vector.extract_strided_slice %16 {offsets = [4, 0], sizes = [2, 256], strides = [1, 1]} : vector<8x256xf32> to vector<2x256xf32>
    %56 = arith.truncf %55 : vector<2x256xf32> to vector<2x256xbf16>
    %cst_21 = arith.constant dense<0.000000e+00> : vector<128x256xf32>
    %57 = tpu.matmul %53, %54, %cst_21 {dimension_numbers = #tpu.dot_dimension_numbers<[1], [0], [0], [1], [0, 0, 1, 1], [], []>} : vector<128x2xf32>, vector<2x256xf32>, vector<128x256xf32> -> vector<128x256xf32>
    %cst_22 = arith.constant dense<0xFF800000> : vector<128xf32>
    %58 = vector.multi_reduction <maximumf>, %57, %cst_22 [1] : vector<128x256xf32> to vector<128xf32>
    %59 = vector.shape_cast %58 : vector<128xf32> to vector<128x1xf32>
    %60 = vector.broadcast %59 : vector<128x1xf32> to vector<128x256xf32>
    %61 = arith.subf %57, %60 : vector<128x256xf32>
    %62 = math.exp %61 : vector<128x256xf32>
    %cst_23 = arith.constant dense<0.000000e+00> : vector<128xf32>
    %63 = vector.multi_reduction <add>, %62, %cst_23 [1] : vector<128x256xf32> to vector<128xf32>
    %64 = vector.shape_cast %63 : vector<128xf32> to vector<128x1xf32>
    %65 = tpu.reciprocal %64 {approx = true} : vector<128x1xf32> -> vector<128x1xf32>
    %66 = vector.broadcast %65 : vector<128x1xf32> to vector<128x256xf32>
    %67 = arith.mulf %62, %66 : vector<128x256xf32>
    %68 = arith.truncf %67 : vector<128x256xf32> to vector<128x256xbf16>
    %cst_24 = arith.constant dense<0.000000e+00> : vector<2x128xf32>
    %69 = tpu.matmul %56, %68, %cst_24 {dimension_numbers = #tpu.dot_dimension_numbers<[1], [1], [0], [0], [0, 0, 1, 0], [], []>} : vector<2x256xbf16>, vector<128x256xbf16>, vector<2x128xf32> -> vector<2x128xf32>
    %c4 = arith.constant 4 : index
    %c0_25 = arith.constant 0 : index
    %70 = vector.load %arg8[%c4, %c0_25] : memref<8x128xf32, #tpu.memory_space<vmem>>, vector<2x128xf32>
    tpu.vector_store %arg8[%c4, %c0_25], %69 {strides = array<i32>} : memref<8x128xf32, #tpu.memory_space<vmem>>, vector<2x128xf32>,
    %71 = vector.extract_strided_slice %14 {offsets = [0, 6], sizes = [128, 2], strides = [1, 1]} : vector<128x8xf32> to vector<128x2xf32>
    %72 = vector.extract_strided_slice %15 {offsets = [6, 0], sizes = [2, 256], strides = [1, 1]} : vector<8x256xf32> to vector<2x256xf32>
    %73 = vector.extract_strided_slice %16 {offsets = [6, 0], sizes = [2, 256], strides = [1, 1]} : vector<8x256xf32> to vector<2x256xf32>
    %74 = arith.truncf %73 : vector<2x256xf32> to vector<2x256xbf16>
    %cst_26 = arith.constant dense<0.000000e+00> : vector<128x256xf32>
    %75 = tpu.matmul %71, %72, %cst_26 {dimension_numbers = #tpu.dot_dimension_numbers<[1], [0], [0], [1], [0, 0, 1, 1], [], []>} : vector<128x2xf32>, vector<2x256xf32>, vector<128x256xf32> -> vector<128x256xf32>
    %cst_27 = arith.constant dense<0xFF800000> : vector<128xf32>
    %76 = vector.multi_reduction <maximumf>, %75, %cst_27 [1] : vector<128x256xf32> to vector<128xf32>
    %77 = vector.shape_cast %76 : vector<128xf32> to vector<128x1xf32>
    %78 = vector.broadcast %77 : vector<128x1xf32> to vector<128x256xf32>
    %79 = arith.subf %75, %78 : vector<128x256xf32>
    %80 = math.exp %79 : vector<128x256xf32>
    %cst_28 = arith.constant dense<0.000000e+00> : vector<128xf32>
    %81 = vector.multi_reduction <add>, %80, %cst_28 [1] : vector<128x256xf32> to vector<128xf32>
    %82 = vector.shape_cast %81 : vector<128xf32> to vector<128x1xf32>
    %83 = tpu.reciprocal %82 {approx = true} : vector<128x1xf32> -> vector<128x1xf32>
    %84 = vector.broadcast %83 : vector<128x1xf32> to vector<128x256xf32>
    %85 = arith.mulf %80, %84 : vector<128x256xf32>
    %86 = arith.truncf %85 : vector<128x256xf32> to vector<128x256xbf16>
    %cst_29 = arith.constant dense<0.000000e+00> : vector<2x128xf32>
    %87 = tpu.matmul %74, %86, %cst_29 {dimension_numbers = #tpu.dot_dimension_numbers<[1], [1], [0], [0], [0, 0, 1, 0], [], []>} : vector<2x256xbf16>, vector<128x256xbf16>, vector<2x128xf32> -> vector<2x128xf32>
    %c6 = arith.constant 6 : index
    %c0_30 = arith.constant 0 : index
    %88 = vector.load %arg8[%c6, %c0_30] : memref<8x128xf32, #tpu.memory_space<vmem>>, vector<2x128xf32>
    tpu.vector_store %arg8[%c6, %c0_30], %87 {strides = array<i32>} : memref<8x128xf32, #tpu.memory_space<vmem>>, vector<2x128xf32>,
    %c0_31 = arith.constant 0 : index
    %c0_32 = arith.constant 0 : index
    %89 = vector.load %arg8[%c0_31, %c0_32] : memref<8x128xf32, #tpu.memory_space<vmem>>, vector<8x128xf32>
    %90 = arith.truncf %89 : vector<8x128xf32> to vector<8x128xbf16>
    %c0_33 = arith.constant 0 : index
    %c0_34 = arith.constant 0 : index
    %91 = vector.load %arg5[%c0_33, %c0_34] : memref<4x8xf32, #tpu.memory_space<vmem>>, vector<4x8xf32>
    %92 = arith.truncf %91 : vector<4x8xf32> to vector<4x8xbf16>
    %cst_35 = arith.constant dense<0.000000e+00> : vector<4x128xf32>
    %93 = tpu.matmul %92, %90, %cst_35 {dimension_numbers = #tpu.dot_dimension_numbers<[1], [0], [0], [1], [0, 0, 1, 1], [], []>} : vector<4x8xbf16>, vector<8x128xbf16>, vector<4x128xf32> -> vector<4x128xf32>
    %c0_36 = arith.constant 0 : index
    %c0_37 = arith.constant 0 : index
    %94 = vector.load %arg6[%c0_36, %c0_37] : memref<4x1xf32, #tpu.memory_space<vmem>>, vector<4x1xf32>
    %95 = vector.broadcast %94 : vector<4x1xf32> to vector<4x128xf32>
    %96 = arith.addf %93, %95 : vector<4x128xf32>
    %c0_38 = arith.constant 0 : index
    %c0_39 = arith.constant 0 : index
    %c0_40 = arith.constant 0 : index
    %97 = vector.load %arg7[%c0_38, %c0_39, %c0_40] : memref<1x4x128xf32, #tpu.memory_space<vmem>>, vector<1x4x128xf32>
    %98 = vector.shape_cast %97 : vector<1x4x128xf32> to vector<4x128xf32>
    %99 = vector.shape_cast %96 : vector<4x128xf32> to vector<1x4x128xf32>
    tpu.vector_store %arg7[%c0_38, %c0_39, %c0_40], %99 {strides = array<i32>} : memref<1x4x128xf32, #tpu.memory_space<vmem>>, vector<1x4x128xf32>,
    return
  }
  func.func @transform_0(%arg0: i32, %arg1: i32) -> (i32, i32, i32) {
    %c0_i32 = arith.constant 0 : i32
    %c0_i32_0 = arith.constant 0 : i32
    return %arg0, %c0_i32, %arg1 : i32, i32, i32
  }
  func.func @transform_1(%arg0: i32, %arg1: i32) -> (i32, i32, i32) {
    %c0_i32 = arith.constant 0 : i32
    %c0_i32_0 = arith.constant 0 : i32
    %c0_i32_1 = arith.constant 0 : i32
    return %arg0, %c0_i32, %c0_i32_0 : i32, i32, i32
  }
  func.func @transform_2(%arg0: i32, %arg1: i32) -> (i32, i32) {
    %c0_i32 = arith.constant 0 : i32
    %c0_i32_0 = arith.constant 0 : i32
    %c0_i32_1 = arith.constant 0 : i32
    return %c0_i32, %c0_i32_0 : i32, i32
  }
  func.func @transform_3(%arg0: i32, %arg1: i32) -> (i32, i32) {
    %c0_i32 = arith.constant 0 : i32
    %c0_i32_0 = arith.constant 0 : i32
    %c0_i32_1 = arith.constant 0 : i32
    return %c0_i32, %c0_i32_0 : i32, i32
  }
  func.func @transform_4(%arg0: i32, %arg1: i32) -> (i32, i32) {
    %c0_i32 = arith.constant 0 : i32
    %c0_i32_0 = arith.constant 0 : i32
    %c0_i32_1 = arith.constant 0 : i32
    return %c0_i32, %c0_i32_0 : i32, i32
  }
  func.func @transform_5(%arg0: i32, %arg1: i32) -> (i32, i32, i32) {
    %c0_i32 = arith.constant 0 : i32
    %c0_i32_0 = arith.constant 0 : i32
    return %arg0, %c0_i32, %arg1 : i32, i32, i32
  }
}

</mosaic_0001>

<llo_original>
// kernel: tpu_custom_call.1
$region0: #{tpu_custom_call.1}
  #allocation0 [shape = 'u32[]', space=smem, size = 0x4, offset = 0x4, fixed_abs, tag = 'smem constant byte address 0x4 - core index']
  #allocation1 [shape = 'u32[72,128]{1,0:T(1,128)}', space=vmem, size = 0x9000, scoped, tag = 'internal scratch']
  #allocation2 [shape = 'f32[8,128]{1,0:T(8,128)}', space=vmem, size = 0x1000, scoped, tag = 'scratch operand']
  %s0 = inlined_call_operand.vmem [shape: f32[2,4,256], index: 0, kind: input, shape index: {}]
  %s1 = inlined_call_operand.hbm [shape: f32[2,4,256], index: 1, kind: input, shape index: {}]
  %s2 = inlined_call_operand.vmem [shape: f32[24,4], index: 2, kind: input, shape index: {}]
  %s3 = inlined_call_operand.vmem [shape: f32[4,8], index: 3, kind: input, shape index: {}]
  %s4 = inlined_call_operand.vmem [shape: f32[4,1], index: 4, kind: input, shape index: {}]
  %s5 = inlined_call_operand.hbm [shape: f32[2,4,256], index: 5, kind: output, shape index: {}]
  %s6 = sld [smem:[#allocation0]]
  $region57: #{tpu_custom_call.1} parent=0
    _
  %s8 = ssub.s32 1, %s6
  %s9 = scalar_select 0, %s8, %s6
  $region1: #{tpu_custom_call.1} parent=0
    #allocation3 [shape = 'u8[8192]{0}', space=vmem, size = 0x2000, scoped, tag = 'input window, operand 1']
    #allocation4 [shape = 's32[2]{0}', space=sflag, size = 0x8, scoped, tag = 'scoped memory for tpu_custom_call.1']
    #allocation5 [shape = 's32[2]{0}', space=sflag, size = 0x8, scoped, tag = 'scoped memory for tpu_custom_call.1']
    #allocation6 [shape = 'u8[4096]{0}', space=vmem, size = 0x1000, scoped, tag = 'output window, operand 0']
    %10 = vsyncpa [#allocation4], 0
    %s11 = scalar_lea.sflag [#allocation4], 1
    %12 = vsyncpa %s11, 0
    %13 = vsyncpa [#allocation5], 0
    %s14 = scalar_lea.sflag [#allocation5], 1
    %15 = vsyncpa %s14, 0
    loop: start=0, step=1, limit=6
    $region2: #{tpu_custom_call.1} parent=1 // loop_pre_header
      _
    $region3: #{tpu_custom_call.1} parent=1 // loop_header
      %s17 = sphi 0, %s21
      %p18 = scmp.ge.s32.totalorder %s17, 6
      %s24 = sphi 0, %s36
      %s25 = sphi 0, %s32
      %s26 = sphi 0, %s24
      %s27 = sphi 0, %s25
      %s28 = sphi 0, %s26
      %s29 = sphi 0, %s27
      %s41 = sphi 0, %s43
      %s44 = sphi 0, %s41
      %s45 = sphi 0, %s44
      %s61 = sphi 0, %s45
      %s67 = sphi 0, %s69
      %s70 = sphi 0, %s67
      %s71 = sphi 0, %s70
      %s87 = sphi 0, %s71
      %s91 = sphi 0, %s91
      %s93 = sphi 0, %s91
      %s94 = sphi 0, %s93
      %s108 = sphi 0, %s94
      %s112 = sphi 0, %s112
      %s114 = sphi 0, %s112
      %s115 = sphi 0, %s114
      %s129 = sphi 0, %s115
      %s133 = sphi 0, %s133
      %s135 = sphi 0, %s133
      %s136 = sphi 0, %s135
      %s150 = sphi 0, %s136
      %s158 = sphi 0, %s160
      %s161 = sphi 0, %s158
      %s162 = sphi 0, %s161
      %s178 = sphi 0, %s162
    $region4: #{tpu_custom_call.1} parent=1 // loop_header_branch
      %20 = sbr.rel (%p18) target = $region8
    $region5: #{tpu_custom_call.1} parent=1 // loop_body
      %s22 = ssub.s32 %s17, 1
      %s23 = ssub.s32 %s17, 2
      %s30 = sadd.s32 1, %s25
      %p31 = scmp.ge.s32.totalorder %s30, 2
      %s32 = scalar_select %p31, 0, %s30
      %s33 = sadd.s32 1, %s24
      %s34 = scalar_select %p31, %s33, %s24
      %p35 = scmp.ge.s32.totalorder %s34, 2
      %s36 = scalar_select %p35, 0, %s34
      %s37 = ssub.s32 %s24, %s36
      %s38 = ssub.s32 %s25, %s32
      %s39 = sor.u32 %s37, %s38
      %p40 = scmp.eq.s32.totalorder %s39, 0
      %s42 = sadd.s32 %s41, 1
      %s43 = scalar_select %p40, %s41, %s42
      %p46 = pneg %p40
      %p47 = scmp.eq.s32.totalorder %s17, 3
      %p48 = por %p46, %p47
      %p49 = scmp.ne.s32.totalorder %s41, %s44
      %p50 = scmp.eq.s32.totalorder %s17, 0
      %p51 = por %p49, %p50
      %p52 = scmp.ne.s32.totalorder %s41, %s44
      %p53 = scmp.eq.s32.totalorder %s22, 3
      %p54 = por %p52, %p53
      %p55 = scmp.ne.s32.totalorder %s44, %s45
      %p56 = scmp.eq.s32.totalorder %s22, 0
      %p57 = por %p55, %p56
      %p58 = scmp.ne.s32.totalorder %s44, %s45
      %p59 = scmp.eq.s32.totalorder %s23, 3
      %p60 = por %p58, %p59
      %p62 = scmp.ne.s32.totalorder %s45, %s61
      %p63 = scmp.eq.s32.totalorder %s23, 0
      %p64 = por %p62, %p63
      %s65 = ssub.s32 %s24, %s36
      %p66 = scmp.eq.s32.totalorder %s65, 0
      %s68 = sadd.s32 %s67, 1
      %s69 = scalar_select %p66, %s67, %s68
      %p72 = pneg %p66
      %p73 = scmp.eq.s32.totalorder %s17, 3
      %p74 = por %p72, %p73
      %p75 = scmp.ne.s32.totalorder %s67, %s70
      %p76 = scmp.eq.s32.totalorder %s17, 0
      %p77 = por %p75, %p76
      %p78 = scmp.ne.s32.totalorder %s67, %s70
      %p79 = scmp.eq.s32.totalorder %s22, 3
      %p80 = por %p78, %p79
      %p81 = scmp.ne.s32.totalorder %s70, %s71
      %p82 = scmp.eq.s32.totalorder %s22, 0
      %p83 = por %p81, %p82
      %p84 = scmp.ne.s32.totalorder %s70, %s71
      %p85 = scmp.eq.s32.totalorder %s23, 3
      %p86 = por %p84, %p85
      %p88 = scmp.ne.s32.totalorder %s71, %s87
      %p89 = scmp.eq.s32.totalorder %s23, 0
      %p90 = por %p88, %p89
      %s92 = sadd.s32 %s91, 1
      %p95 = scmp.eq.s32.totalorder %s17, 3
      %p96 = scmp.ne.s32.totalorder %s91, %s93
      %p97 = scmp.eq.s32.totalorder %s17, 0
      %p98 = por %p96, %p97
      %p99 = scmp.ne.s32.totalorder %s91, %s93
      %p100 = scmp.eq.s32.totalorder %s22, 3
      %p101 = por %p99, %p100
      %p102 = scmp.ne.s32.totalorder %s93, %s94
      %p103 = scmp.eq.s32.totalorder %s22, 0
      %p104 = por %p102, %p103
      %p105 = scmp.ne.s32.totalorder %s93, %s94
      %p106 = scmp.eq.s32.totalorder %s23, 3
      %p107 = por %p105, %p106
      %p109 = scmp.ne.s32.totalorder %s94, %s108
      %p110 = scmp.eq.s32.totalorder %s23, 0
      %p111 = por %p109, %p110
      %s113 = sadd.s32 %s112, 1
      %p116 = scmp.eq.s32.totalorder %s17, 3
      %p117 = scmp.ne.s32.totalorder %s112, %s114
      %p118 = scmp.eq.s32.totalorder %s17, 0
      %p119 = por %p117, %p118
      %p120 = scmp.ne.s32.totalorder %s112, %s114
      %p121 = scmp.eq.s32.totalorder %s22, 3
      %p122 = por %p120, %p121
      %p123 = scmp.ne.s32.totalorder %s114, %s115
      %p124 = scmp.eq.s32.totalorder %s22, 0
      %p125 = por %p123, %p124
      %p126 = scmp.ne.s32.totalorder %s114, %s115
      %p127 = scmp.eq.s32.totalorder %s23, 3
      %p128 = por %p126, %p127
      %p130 = scmp.ne.s32.totalorder %s115, %s129
      %p131 = scmp.eq.s32.totalorder %s23, 0
      %p132 = por %p130, %p131
      %s134 = sadd.s32 %s133, 1
      %p137 = scmp.eq.s32.totalorder %s17, 3
      %p138 = scmp.ne.s32.totalorder %s133, %s135
      %p139 = scmp.eq.s32.totalorder %s17, 0
      %p140 = por %p138, %p139
      %p141 = scmp.ne.s32.totalorder %s133, %s135
      %p142 = scmp.eq.s32.totalorder %s22, 3
      %p143 = por %p141, %p142
      %p144 = scmp.ne.s32.totalorder %s135, %s136
      %p145 = scmp.eq.s32.totalorder %s22, 0
      %p146 = por %p144, %p145
      %p147 = scmp.ne.s32.totalorder %s135, %s136
      %p148 = scmp.eq.s32.totalorder %s23, 3
      %p149 = por %p147, %p148
      %p151 = scmp.ne.s32.totalorder %s136, %s150
      %p152 = scmp.eq.s32.totalorder %s23, 0
      %p153 = por %p151, %p152
      %s154 = ssub.s32 %s24, %s36
      %s155 = ssub.s32 %s25, %s32
      %s156 = sor.u32 %s154, %s155
      %p157 = scmp.eq.s32.totalorder %s156, 0
      %s159 = sadd.s32 %s158, 1
      %s160 = scalar_select %p157, %s158, %s159
      %p163 = pneg %p157
      %p164 = scmp.eq.s32.totalorder %s17, 3
      %p165 = por %p163, %p164
      %p166 = scmp.ne.s32.totalorder %s158, %s161
      %p167 = scmp.eq.s32.totalorder %s17, 0
      %p168 = por %p166, %p167
      %p169 = scmp.ne.s32.totalorder %s158, %s161
      %p170 = scmp.eq.s32.totalorder %s22, 3
      %p171 = por %p169, %p170
      %p172 = scmp.ne.s32.totalorder %s161, %s162
      %p173 = scmp.eq.s32.totalorder %s22, 0
      %p174 = por %p172, %p173
      %p175 = scmp.ne.s32.totalorder %s161, %s162
      %p176 = scmp.eq.s32.totalorder %s23, 3
      %p177 = por %p175, %p176
      %p179 = scmp.ne.s32.totalorder %s162, %s178
      %p180 = scmp.eq.s32.totalorder %s23, 0
      %p181 = por %p179, %p180
      %p182 = scmp.le.s32.totalorder 1, %s17
      %p183 = scmp.lt.s32.totalorder %s17, 5
      %p184 = pnand %p182, %p183
      %p185 = pneg %p184
      // Predicated region
      $region9: #{tpu_custom_call.1} parent=5 // pred_check
        _
      $region10: #{tpu_custom_call.1} parent=5 // pred_check_branch
        %187 = sbr.rel (%p184) target = $region12
      $region11: #{tpu_custom_call.1} parent=5 // pred_region
        %s188 = ssub.s32 %s17, 1
        // Predicated region
        $region13: #{tpu_custom_call.1} parent=11 // pred_check
          %p189 = pneg %p104
        $region14: #{tpu_custom_call.1} parent=11 // pred_check_branch
          %191 = sbr.rel (%p189) target = $region16
        $region15: #{tpu_custom_call.1} parent=11 // pred_region
          _
        $region16: #{tpu_custom_call.1} parent=11 // pred_fallthru
          _
        // Predicated region
        $region17: #{tpu_custom_call.1} parent=11 // pred_check
          %p192 = pneg %p125
        $region18: #{tpu_custom_call.1} parent=11 // pred_check_branch
          %194 = sbr.rel (%p192) target = $region20
        $region19: #{tpu_custom_call.1} parent=11 // pred_region
          _
        $region20: #{tpu_custom_call.1} parent=11 // pred_fallthru
          _
        // Predicated region
        $region21: #{tpu_custom_call.1} parent=11 // pred_check
          %p195 = pneg %p146
        $region22: #{tpu_custom_call.1} parent=11 // pred_check_branch
          %197 = sbr.rel (%p195) target = $region24
        $region23: #{tpu_custom_call.1} parent=11 // pred_region
          _
        $region24: #{tpu_custom_call.1} parent=11 // pred_fallthru
          _
      $region12: #{tpu_custom_call.1} parent=5 // pred_fallthru
        _
      %p198 = scmp.lt.s32.totalorder %s17, 4
      // Predicated region
      $region25: #{tpu_custom_call.1} parent=5 // pred_check
        %p199 = pneg %p198
      $region26: #{tpu_custom_call.1} parent=5 // pred_check_branch
        %201 = sbr.rel (%p199) target = $region28
      $region27: #{tpu_custom_call.1} parent=5 // pred_region
        // Predicated region
        $region29: #{tpu_custom_call.1} parent=27 // pred_check
          %p202 = pneg %p51
        $region30: #{tpu_custom_call.1} parent=27 // pred_check_branch
          %204 = sbr.rel (%p202) target = $region32
        $region31: #{tpu_custom_call.1} parent=27 // pred_region
          %p205 = scmp.lt.s32.totalorder %s24, 1
          %s206 = scalar_select %p205, %s24, 1
          %p207 = scmp.lt.s32.totalorder %s25, 1
          %s208 = scalar_select %p207, %s25, 1
          %s209 = smul.addr %s206, 2
          %s210 = sadd.s32 %s208, %s209
          %s211 = smul.addr %s210, 4
          %s212 = scalar_lea.vmem %s0, %s211
        $region32: #{tpu_custom_call.1} parent=27 // pred_fallthru
          _
        // Predicated region
        $region33: #{tpu_custom_call.1} parent=27 // pred_check
          %p213 = pneg %p77
        $region34: #{tpu_custom_call.1} parent=27 // pred_check_branch
          %215 = sbr.rel (%p213) target = $region36
        $region35: #{tpu_custom_call.1} parent=27 // pred_region
          %s216 = sand.u32 %s67, 1
          %s217 = scalar_lea.sflag [#allocation4], %s216
          %s218 = sand.u32 %s67, 1
          %s219 = smul.addr %s218, 8
          %s220 = scalar_lea.vmem [#allocation3], %s219
          %222 = vsyncadd %s217, 0
          %s223 = smul.addr %s24, 2
          %s224 = smul.addr %s223, 4
          %s225 = scalar_lea.hbm %s1, %s224
          %s227 = sshll.u32 %s225, 4
          %s228 = int_to_ptr.hbm [resolvable:$true] %s227
          %s229 = sshll.u32 %s220, 4
          %s230 = int_to_ptr.vmem [resolvable:$true] %s229
          %232 = dma.hbm_to_vmem [thread:$0]  %s228, 128, %s230, %s217
        $region36: #{tpu_custom_call.1} parent=27 // pred_fallthru
          _
      $region28: #{tpu_custom_call.1} parent=5 // pred_fallthru
        _
      %p233 = scmp.le.s32.totalorder 1, %s17
      %p234 = scmp.lt.s32.totalorder %s17, 5
      %p235 = pnand %p233, %p234
      %p236 = pneg %p235
      // Predicated region
      $region37: #{tpu_custom_call.1} parent=5 // pred_check
        _
      $region38: #{tpu_custom_call.1} parent=5 // pred_check_branch
        %238 = sbr.rel (%p235) target = $region40
      $region39: #{tpu_custom_call.1} parent=5 // pred_region
        %s239 = ssub.s32 %s17, 1
        %s240 = sand.u32 %s70, 1
        %s241 = scalar_lea.sflag [#allocation4], %s240
        %s242 = sand.u32 %s70, 1
        %s243 = smul.addr %s242, 8
        %s244 = scalar_lea.vmem [#allocation3], %s243
        // Predicated region
        $region41: #{tpu_custom_call.1} parent=39 // pred_check
          %p245 = pneg %p83
        $region42: #{tpu_custom_call.1} parent=39 // pred_check_branch
          %247 = sbr.rel (%p245) target = $region44
        $region43: #{tpu_custom_call.1} parent=39 // pred_region
          %249 = dma.done %s241, 128
        $region44: #{tpu_custom_call.1} parent=39 // pred_fallthru
          _
        %p250 = scmp.lt.s32.totalorder %s26, 1
        %s251 = scalar_select %p250, %s26, 1
        %p252 = scmp.lt.s32.totalorder %s27, 1
        %s253 = scalar_select %p252, %s27, 1
        %s254 = smul.addr %s251, 2
        %s255 = sadd.s32 %s253, %s254
        %s256 = smul.addr %s255, 4
        %s257 = scalar_lea.vmem %s0, %s256
        %p258 = pneg %p57
        %p259 = pneg %p54
        %s260 = sand.u32 %s70, 1
        %s261 = scalar_lea.sflag [#allocation4], %s260
        %s262 = sand.u32 %s70, 1
        %s263 = smul.addr %s262, 8
        %s264 = scalar_lea.vmem [#allocation3], %s263
        %p265 = pneg %p83
        %p266 = pneg %p80
        %p267 = pneg %p104
        %p268 = pneg %p101
        %p269 = pneg %p125
        %p270 = pneg %p122
        %p271 = pneg %p146
        %p272 = pneg %p143
        %p273 = pneg %p174
        %p274 = pneg %p171
        %s275 = sand.u32 %s161, 1
        %s276 = scalar_lea.sflag [#allocation5], %s275
        %s277 = sand.u32 %s161, 1
        %s278 = smul.addr %s277, 4
        %s279 = scalar_lea.vmem [#allocation6], %s278
        %p280 = scmp.lt.s32.totalorder %s26, 1
        %s281 = scalar_select %p280, %s26, 1
        %p282 = scmp.lt.s32.totalorder %s27, 1
        %s283 = scalar_select %p282, %s27, 1
        %s284 = smul.addr %s281, 2
        %s285 = sadd.s32 %s283, %s284
        %s286 = smul.addr %s285, 4
        %s287 = scalar_lea.vmem %s0, %s286
        %v289 = vld [vmem:[%s287] sm:$0xf]
        %v290 = vpack.c.bf16 %v289, %v289
        %v291 = vld [vmem:[%s244] sm:$0xff]
        %293 = vst [vmem:[#allocation1] ss:$2 sm:$0xff] %v291
        %v294 = vld.sshfl [vmem:[#allocation1] sm:$0xff pattern:$0x75316420]
        %v295 = vld.sshfl [vmem:[#allocation1 + $0x8] sm:$0xff pattern:$0x75316420]
        %v298 = vpack.c.bf16 %v294, %v294
        %v299 = vpack.c.bf16 %v295, %v295
        %v300 = vld [vmem:[%s2] sm:$0xff]
        %v301 = vpack.c.bf16 %v300, %v300
        %v302 = vld [vmem:[%s2 + $0x8] sm:$0xff]
        %v303 = vld [vmem:[%s2 + $0x10] sm:$0xff]
        %v304 = vpack.c.bf16 %v303, %v302
        %vm305 = vcmask 31744
        %v307 = vsel %vm305, %v301, 0
        %vm309 = vcmask 1041408
        %v311 = vsel %vm309, %v290, 0
        %313 = vmatpush.bf16.msra.mxu0 0
        %314 = vmatpush.bf16.msra.mxu0 0
        %315 = vmatpush.bf16.msra.mxu0 0
        %316 = vmatpush.bf16.msra.mxu0 0
        %317 = vmatpush.bf16.msra.mxu0 0
        %318 = vmatpush.bf16.msra.mxu0 0
        %319 = vmatpush.bf16.msra.mxu0 0
        %320 = vmatpush.bf16.msra.mxu0 %v311
        %321 = vmatmul.bf16.gmra.mxu0 %v307
        %v322 = vpop.f32.mrf.mxu0
        %v323 = vadd.f32 0.0, %v322
        %v324 = vpop.f32.mrf.mxu0
        %325 = vdwg.mxu0
        %v327 = vsel %vm305, %v304, 0
        %v330 = vsel %vm309, %v298, 0
        %v333 = vsel %vm309, %v299, 0
        %335 = vmatpush.bf16.msra.mxu0 0
        %336 = vmatpush.bf16.msra.mxu0 0
        %337 = vmatpush.bf16.msra.mxu0 0
        %338 = vmatpush.bf16.msra.mxu0 0
        %339 = vmatpush.bf16.msra.mxu0 0
        %340 = vmatpush.bf16.msra.mxu0 0
        %341 = vmatpush.bf16.msra.mxu0 0
        %342 = vmatpush.bf16.msra.mxu0 %v330
        %343 = vmatmul.bf16.gmra.mxu0 %v327
        %v344 = vpop.f32.mrf.mxu0
        %v345 = vadd.f32 0.0, %v344
        %v346 = vpop.f32.mrf.mxu0
        %v347 = vadd.f32 0.0, %v346
        %348 = vdwg.mxu0
        %349 = vmatpush.bf16.msra.mxu0 0
        %350 = vmatpush.bf16.msra.mxu0 0
        %351 = vmatpush.bf16.msra.mxu0 0
        %352 = vmatpush.bf16.msra.mxu0 0
        %353 = vmatpush.bf16.msra.mxu0 0
        %354 = vmatpush.bf16.msra.mxu0 0
        %355 = vmatpush.bf16.msra.mxu0 0
        %356 = vmatpush.bf16.msra.mxu0 %v333
        %357 = vmatmul.bf16.gmra.mxu0 %v327
        %v358 = vpop.f32.mrf.mxu0
        %v359 = vadd.f32 0.0, %v358
        %v360 = vpop.f32.mrf.mxu0
        %v361 = vadd.f32 0.0, %v360
        %362 = vdwg.mxu0
        %v363 = vmul.f32 %v323, 0.70710677
        %364 = vxpose.xlu0.b32.start [1/16] %v363, 128
        %365 = vxpose.xlu0.b32.cont [2/16] 0.0, 128
        %366 = vxpose.xlu0.b32.cont [3/16] 0.0, 128
        %367 = vxpose.xlu0.b32.cont [4/16] 0.0, 128
        %368 = vxpose.xlu0.b32.cont [5/16] 0.0, 128
        %369 = vxpose.xlu0.b32.cont [6/16] 0.0, 128
        %370 = vxpose.xlu0.b32.cont [7/16] 0.0, 128
        %371 = vxpose.xlu0.b32.cont [8/16] 0.0, 128
        %372 = vxpose.xlu0.b32.cont [9/16] 0.0, 128
        %373 = vxpose.xlu0.b32.cont [10/16] 0.0, 128
        %374 = vxpose.xlu0.b32.cont [11/16] 0.0, 128
        %375 = vxpose.xlu0.b32.cont [12/16] 0.0, 128
        %376 = vxpose.xlu0.b32.cont [13/16] 0.0, 128
        %377 = vxpose.xlu0.b32.cont [14/16] 0.0, 128
        %378 = vxpose.xlu0.b32.cont [15/16] 0.0, 128
        %379 = vxpose.xlu0.b32.end [16/16] 0.0, 128
        %v380 = vpop.trf.xlu0
        %v381 = vpop.trf.xlu0
        %v382 = vpop.trf.xlu0
        %v383 = vpop.trf.xlu0
        %v384 = vpop.trf.xlu0
        %v385 = vpop.trf.xlu0
        %v386 = vpop.trf.xlu0
        %v387 = vpop.trf.xlu0
        %v388 = vpop.trf.xlu0
        %v389 = vpop.trf.xlu0
        %v390 = vpop.trf.xlu0
        %v391 = vpop.trf.xlu0
        %v392 = vpop.trf.xlu0
        %v393 = vpop.trf.xlu0
        %v394 = vpop.trf.xlu0
        %v395 = vpop.trf.xlu0
        %v396 = vpack.c.bf16 %v347, %v347
        %v397 = vpack.c.bf16 %v361, %v361
        %vm398 = vcmask 15360
        %v400 = vsel %vm398, %v380, 0
        %v403 = vsel %vm398, %v381, 0
        %v406 = vsel %vm398, %v382, 0
        %v409 = vsel %vm398, %v383, 0
        %v412 = vsel %vm398, %v384, 0
        %v415 = vsel %vm398, %v385, 0
        %v418 = vsel %vm398, %v386, 0
        %v421 = vsel %vm398, %v387, 0
        %v424 = vsel %vm398, %v388, 0
        %v427 = vsel %vm398, %v389, 0
        %v430 = vsel %vm398, %v390, 0
        %v433 = vsel %vm398, %v391, 0
        %v436 = vsel %vm398, %v392, 0
        %v439 = vsel %vm398, %v393, 0
        %v442 = vsel %vm398, %v394, 0
        %v445 = vsel %vm398, %v395, 0
        %v448 = vsel %vm309, %v345, 0
        %v451 = vsel %vm309, %v359, 0
        %453 = vmatpush.msra.mxu0 0.0
        %454 = vmatpush.msra.mxu0 0.0
        %455 = vmatpush.msra.mxu0 0.0
        %456 = vmatpush.msra.mxu0 0.0
        %457 = vmatpush.msra.mxu0 0.0
        %458 = vmatpush.msra.mxu0 0.0
        %459 = vmatpush.msra.mxu0 0.0
        %460 = vmatpush.msra.mxu0 0.0
        %461 = vmatpush.msra.mxu0 0.0
        %462 = vmatpush.msra.mxu0 0.0
        %463 = vmatpush.msra.mxu0 0.0
        %464 = vmatpush.msra.mxu0 0.0
        %465 = vmatpush.msra.mxu0 0.0
        %466 = vmatpush.msra.mxu0 0.0
        %467 = vmatpush.msra.mxu0 0.0
        %468 = vmatpush.msra.mxu0 %v448
        %469 = vmatmul.f32.gmra.mxu0 %v400
        %v470 = vpop.f32.mrf.mxu0
        %v471 = vadd.f32 0.0, %v470
        %472 = vmatmul.f32.gmra.mxu0 %v403
        %v473 = vpop.f32.mrf.mxu0
        %v474 = vadd.f32 0.0, %v473
        %475 = vmatmul.f32.gmra.mxu0 %v406
        %v476 = vpop.f32.mrf.mxu0
        %v477 = vadd.f32 0.0, %v476
        %478 = vmatmul.f32.gmra.mxu0 %v409
        %v479 = vpop.f32.mrf.mxu0
        %v480 = vadd.f32 0.0, %v479
        %481 = vmatmul.f32.gmra.mxu0 %v412
        %v482 = vpop.f32.mrf.mxu0
        %v483 = vadd.f32 0.0, %v482
        %484 = vmatmul.f32.gmra.mxu0 %v415
        %v485 = vpop.f32.mrf.mxu0
        %v486 = vadd.f32 0.0, %v485
        %487 = vmatmul.f32.gmra.mxu0 %v418
        %v488 = vpop.f32.mrf.mxu0
        %v489 = vadd.f32 0.0, %v488
        %490 = vmatmul.f32.gmra.mxu0 %v421
        %v491 = vpop.f32.mrf.mxu0
        %v492 = vadd.f32 0.0, %v491
        %493 = vmatmul.f32.gmra.mxu0 %v424
        %v494 = vpop.f32.mrf.mxu0
        %v495 = vadd.f32 0.0, %v494
        %496 = vmatmul.f32.gmra.mxu0 %v427
        %v497 = vpop.f32.mrf.mxu0
        %v498 = vadd.f32 0.0, %v497
        %499 = vmatmul.f32.gmra.mxu0 %v430
        %v500 = vpop.f32.mrf.mxu0
        %v501 = vadd.f32 0.0, %v500
        %502 = vmatmul.f32.gmra.mxu0 %v433
        %v503 = vpop.f32.mrf.mxu0
        %v504 = vadd.f32 0.0, %v503
        %505 = vmatmul.f32.gmra.mxu0 %v436
        %v506 = vpop.f32.mrf.mxu0
        %v507 = vadd.f32 0.0, %v506
        %508 = vmatmul.f32.gmra.mxu0 %v439
        %v509 = vpop.f32.mrf.mxu0
        %v510 = vadd.f32 0.0, %v509
        %511 = vmatmul.f32.gmra.mxu0 %v442
        %v512 = vpop.f32.mrf.mxu0
        %v513 = vadd.f32 0.0, %v512
        %514 = vmatmul.f32.gmra.mxu0 %v445
        %v515 = vpop.f32.mrf.mxu0
        %v516 = vadd.f32 0.0, %v515
        %517 = vdwg.mxu0
        %518 = vmatpush.msra.mxu0 0.0
        %519 = vmatpush.msra.mxu0 0.0
        %520 = vmatpush.msra.mxu0 0.0
        %521 = vmatpush.msra.mxu0 0.0
        %522 = vmatpush.msra.mxu0 0.0
        %523 = vmatpush.msra.mxu0 0.0
        %524 = vmatpush.msra.mxu0 0.0
        %525 = vmatpush.msra.mxu0 0.0
        %526 = vmatpush.msra.mxu0 0.0
        %527 = vmatpush.msra.mxu0 0.0
        %528 = vmatpush.msra.mxu0 0.0
        %529 = vmatpush.msra.mxu0 0.0
        %530 = vmatpush.msra.mxu0 0.0
        %531 = vmatpush.msra.mxu0 0.0
        %532 = vmatpush.msra.mxu0 0.0
        %533 = vmatpush.msra.mxu0 %v451
        %534 = vmatmul.f32.gmra.mxu0 %v400
        %v535 = vpop.f32.mrf.mxu0
        %v536 = vadd.f32 0.0, %v535
        %537 = vmatmul.f32.gmra.mxu0 %v403
        %v538 = vpop.f32.mrf.mxu0
        %v539 = vadd.f32 0.0, %v538
        %540 = vmatmul.f32.gmra.mxu0 %v406
        %v541 = vpop.f32.mrf.mxu0
        %v542 = vadd.f32 0.0, %v541
        %543 = vmatmul.f32.gmra.mxu0 %v409
        %v544 = vpop.f32.mrf.mxu0
        %v545 = vadd.f32 0.0, %v544
        %546 = vmatmul.f32.gmra.mxu0 %v412
        %v547 = vpop.f32.mrf.mxu0
        %v548 = vadd.f32 0.0, %v547
        %549 = vmatmul.f32.gmra.mxu0 %v415
        %v550 = vpop.f32.mrf.mxu0
        %v551 = vadd.f32 0.0, %v550
        %552 = vmatmul.f32.gmra.mxu0 %v418
        %v553 = vpop.f32.mrf.mxu0
        %v554 = vadd.f32 0.0, %v553
        %555 = vmatmul.f32.gmra.mxu0 %v421
        %v556 = vpop.f32.mrf.mxu0
        %v557 = vadd.f32 0.0, %v556
        %558 = vmatmul.f32.gmra.mxu0 %v424
        %v559 = vpop.f32.mrf.mxu0
        %v560 = vadd.f32 0.0, %v559
        %561 = vmatmul.f32.gmra.mxu0 %v427
        %v562 = vpop.f32.mrf.mxu0
        %v563 = vadd.f32 0.0, %v562
        %564 = vmatmul.f32.gmra.mxu0 %v430
        %v565 = vpop.f32.mrf.mxu0
        %v566 = vadd.f32 0.0, %v565
        %567 = vmatmul.f32.gmra.mxu0 %v433
        %v568 = vpop.f32.mrf.mxu0
        %v569 = vadd.f32 0.0, %v568
        %570 = vmatmul.f32.gmra.mxu0 %v436
        %v571 = vpop.f32.mrf.mxu0
        %v572 = vadd.f32 0.0, %v571
        %573 = vmatmul.f32.gmra.mxu0 %v439
        %v574 = vpop.f32.mrf.mxu0
        %v575 = vadd.f32 0.0, %v574
        %576 = vmatmul.f32.gmra.mxu0 %v442
        %v577 = vpop.f32.mrf.mxu0
        %v578 = vadd.f32 0.0, %v577
        %579 = vmatmul.f32.gmra.mxu0 %v445
        %v580 = vpop.f32.mrf.mxu0
        %v581 = vadd.f32 0.0, %v580
        %582 = vdwg.mxu0
        %v583 = vmax.f32 %v471, %v536
        %584 = vmax.xlane.f32.xlu0 %v583
        %v585 = vpop.xlane.xlu0 %584
        %v586 = vmax.f32 %v474, %v539
        %587 = vmax.xlane.f32.xlu0 %v586
        %v588 = vpop.xlane.xlu0 %587
        %v589 = vmax.f32 %v477, %v542
        %590 = vmax.xlane.f32.xlu0 %v589
        %v591 = vpop.xlane.xlu0 %590
        %v592 = vmax.f32 %v480, %v545
        %593 = vmax.xlane.f32.xlu0 %v592
        %v594 = vpop.xlane.xlu0 %593
        %v595 = vmax.f32 %v483, %v548
        %596 = vmax.xlane.f32.xlu0 %v595
        %v597 = vpop.xlane.xlu0 %596
        %v598 = vmax.f32 %v486, %v551
        %599 = vmax.xlane.f32.xlu0 %v598
        %v600 = vpop.xlane.xlu0 %599
        %v601 = vmax.f32 %v489, %v554
        %602 = vmax.xlane.f32.xlu0 %v601
        %v603 = vpop.xlane.xlu0 %602
        %v604 = vmax.f32 %v492, %v557
        %605 = vmax.xlane.f32.xlu0 %v604
        %v606 = vpop.xlane.xlu0 %605
        %v607 = vmax.f32 %v495, %v560
        %608 = vmax.xlane.f32.xlu0 %v607
        %v609 = vpop.xlane.xlu0 %608
        %v610 = vmax.f32 %v498, %v563
        %611 = vmax.xlane.f32.xlu0 %v610
        %v612 = vpop.xlane.xlu0 %611
        %v613 = vmax.f32 %v501, %v566
        %614 = vmax.xlane.f32.xlu0 %v613
        %v615 = vpop.xlane.xlu0 %614
        %v616 = vmax.f32 %v504, %v569
        %617 = vmax.xlane.f32.xlu0 %v616
        %v618 = vpop.xlane.xlu0 %617
        %v619 = vmax.f32 %v507, %v572
        %620 = vmax.xlane.f32.xlu0 %v619
        %v621 = vpop.xlane.xlu0 %620
        %v622 = vmax.f32 %v510, %v575
        %623 = vmax.xlane.f32.xlu0 %v622
        %v624 = vpop.xlane.xlu0 %623
        %v625 = vmax.f32 %v513, %v578
        %626 = vmax.xlane.f32.xlu0 %v625
        %v627 = vpop.xlane.xlu0 %626
        %v628 = vmax.f32 %v516, %v581
        %629 = vmax.xlane.f32.xlu0 %v628
        %v630 = vpop.xlane.xlu0 %629
        %v631 = vsub.f32 %v471, %v585
        %v632 = vsub.f32 %v536, %v585
        %v633 = vsub.f32 %v474, %v588
        %v634 = vsub.f32 %v539, %v588
        %v635 = vsub.f32 %v477, %v591
        %v636 = vsub.f32 %v542, %v591
        %v637 = vsub.f32 %v480, %v594
        %v638 = vsub.f32 %v545, %v594
        %v639 = vsub.f32 %v483, %v597
        %v640 = vsub.f32 %v548, %v597
        %v641 = vsub.f32 %v486, %v600
        %v642 = vsub.f32 %v551, %v600
        %v643 = vsub.f32 %v489, %v603
        %v644 = vsub.f32 %v554, %v603
        %v645 = vsub.f32 %v492, %v606
        %v646 = vsub.f32 %v557, %v606
        %v647 = vsub.f32 %v495, %v609
        %v648 = vsub.f32 %v560, %v609
        %v649 = vsub.f32 %v498, %v612
        %v650 = vsub.f32 %v563, %v612
        %v651 = vsub.f32 %v501, %v615
        %v652 = vsub.f32 %v566, %v615
        %v653 = vsub.f32 %v504, %v618
        %v654 = vsub.f32 %v569, %v618
        %v655 = vsub.f32 %v507, %v621
        %v656 = vsub.f32 %v572, %v621
        %v657 = vsub.f32 %v510, %v624
        %v658 = vsub.f32 %v575, %v624
        %v659 = vsub.f32 %v513, %v627
        %v660 = vsub.f32 %v578, %v627
        %v661 = vsub.f32 %v516, %v630
        %v662 = vsub.f32 %v581, %v630
        %v663 = vmul.f32 %v631, 1.442695
        %v664 = vpow.pop %v663
        %v665 = vmul.f32 %v632, 1.442695
        %v666 = vpow.pop %v665
        %v667 = vmul.f32 %v633, 1.442695
        %v668 = vpow.pop %v667
        %v669 = vmul.f32 %v634, 1.442695
        %v670 = vpow.pop %v669
        %v671 = vmul.f32 %v635, 1.442695
        %v672 = vpow.pop %v671
        %v673 = vmul.f32 %v636, 1.442695
        %v674 = vpow.pop %v673
        %v675 = vmul.f32 %v637, 1.442695
        %v676 = vpow.pop %v675
        %v677 = vmul.f32 %v638, 1.442695
        %v678 = vpow.pop %v677
        %v679 = vmul.f32 %v639, 1.442695
        %v680 = vpow.pop %v679
        %v681 = vmul.f32 %v640, 1.442695
        %v682 = vpow.pop %v681
        %v683 = vmul.f32 %v641, 1.442695
        %v684 = vpow.pop %v683
        %v685 = vmul.f32 %v642, 1.442695
        %v686 = vpow.pop %v685
        %v687 = vmul.f32 %v643, 1.442695
        %v688 = vpow.pop %v687
        %v689 = vmul.f32 %v644, 1.442695
        %v690 = vpow.pop %v689
        %v691 = vmul.f32 %v645, 1.442695
        %v692 = vpow.pop %v691
        %v693 = vmul.f32 %v646, 1.442695
        %v694 = vpow.pop %v693
        %v695 = vmul.f32 %v647, 1.442695
        %v696 = vpow.pop %v695
        %v697 = vmul.f32 %v648, 1.442695
        %v698 = vpow.pop %v697
        %v699 = vmul.f32 %v649, 1.442695
        %v700 = vpow.pop %v699
        %v701 = vmul.f32 %v650, 1.442695
        %v702 = vpow.pop %v701
        %v703 = vmul.f32 %v651, 1.442695
        %v704 = vpow.pop %v703
        %v705 = vmul.f32 %v652, 1.442695
        %v706 = vpow.pop %v705
        %v707 = vmul.f32 %v653, 1.442695
        %v708 = vpow.pop %v707
        %v709 = vmul.f32 %v654, 1.442695
        %v710 = vpow.pop %v709
        %v711 = vmul.f32 %v655, 1.442695
        %v712 = vpow.pop %v711
        %v713 = vmul.f32 %v656, 1.442695
        %v714 = vpow.pop %v713
        %v715 = vmul.f32 %v657, 1.442695
        %v716 = vpow.pop %v715
        %v717 = vmul.f32 %v658, 1.442695
        %v718 = vpow.pop %v717
        %v719 = vmul.f32 %v659, 1.442695
        %v720 = vpow.pop %v719
        %v721 = vmul.f32 %v660, 1.442695
        %v722 = vpow.pop %v721
        %v723 = vmul.f32 %v661, 1.442695
        %v724 = vpow.pop %v723
        %v725 = vmul.f32 %v662, 1.442695
        %v726 = vpow.pop %v725
        %v727 = vadd.f32 %v664, %v666
        %728 = vadd.xlane.f32.xlu0 %v727
        %v729 = vpop.xlane.xlu0 %728
        %v730 = vadd.f32 %v668, %v670
        %731 = vadd.xlane.f32.xlu0 %v730
        %v732 = vpop.xlane.xlu0 %731
        %v733 = vadd.f32 %v672, %v674
        %734 = vadd.xlane.f32.xlu0 %v733
        %v735 = vpop.xlane.xlu0 %734
        %v736 = vadd.f32 %v676, %v678
        %737 = vadd.xlane.f32.xlu0 %v736
        %v738 = vpop.xlane.xlu0 %737
        %v739 = vadd.f32 %v680, %v682
        %740 = vadd.xlane.f32.xlu0 %v739
        %v741 = vpop.xlane.xlu0 %740
        %v742 = vadd.f32 %v684, %v686
        %743 = vadd.xlane.f32.xlu0 %v742
        %v744 = vpop.xlane.xlu0 %743
        %v745 = vadd.f32 %v688, %v690
        %746 = vadd.xlane.f32.xlu0 %v745
        %v747 = vpop.xlane.xlu0 %746
        %v748 = vadd.f32 %v692, %v694
        %749 = vadd.xlane.f32.xlu0 %v748
        %v750 = vpop.xlane.xlu0 %749
        %v751 = vadd.f32 %v696, %v698
        %752 = vadd.xlane.f32.xlu0 %v751
        %v753 = vpop.xlane.xlu0 %752
        %v754 = vadd.f32 %v700, %v702
        %755 = vadd.xlane.f32.xlu0 %v754
        %v756 = vpop.xlane.xlu0 %755
        %v757 = vadd.f32 %v704, %v706
        %758 = vadd.xlane.f32.xlu0 %v757
        %v759 = vpop.xlane.xlu0 %758
        %v760 = vadd.f32 %v708, %v710
        %761 = vadd.xlane.f32.xlu0 %v760
        %v762 = vpop.xlane.xlu0 %761
        %v763 = vadd.f32 %v712, %v714
        %764 = vadd.xlane.f32.xlu0 %v763
        %v765 = vpop.xlane.xlu0 %764
        %v766 = vadd.f32 %v716, %v718
        %767 = vadd.xlane.f32.xlu0 %v766
        %v768 = vpop.xlane.xlu0 %767
        %v769 = vadd.f32 %v720, %v722
        %770 = vadd.xlane.f32.xlu0 %v769
        %v771 = vpop.xlane.xlu0 %770
        %v772 = vadd.f32 %v724, %v726
        %773 = vadd.xlane.f32.xlu0 %v772
        %v774 = vpop.xlane.xlu0 %773
        %v775 = vrcp.pop %v729
        %v776 = vrcp.pop %v732
        %v777 = vrcp.pop %v735
        %v778 = vrcp.pop %v738
        %v779 = vrcp.pop %v741
        %v780 = vrcp.pop %v744
        %v781 = vrcp.pop %v747
        %v782 = vrcp.pop %v750
        %v783 = vrcp.pop %v753
        %v784 = vrcp.pop %v756
        %v785 = vrcp.pop %v759
        %v786 = vrcp.pop %v762
        %v787 = vrcp.pop %v765
        %v788 = vrcp.pop %v768
        %v789 = vrcp.pop %v771
        %v790 = vrcp.pop %v774
        %v791 = vmul.f32 %v664, %v775
        %v792 = vmul.f32 %v666, %v775
        %v793 = vmul.f32 %v668, %v776
        %v794 = vmul.f32 %v670, %v776
        %v795 = vmul.f32 %v672, %v777
        %v796 = vmul.f32 %v674, %v777
        %v797 = vmul.f32 %v676, %v778
        %v798 = vmul.f32 %v678, %v778
        %v799 = vmul.f32 %v680, %v779
        %v800 = vmul.f32 %v682, %v779
        %v801 = vmul.f32 %v684, %v780
        %v802 = vmul.f32 %v686, %v780
        %v803 = vmul.f32 %v688, %v781
        %v804 = vmul.f32 %v690, %v781
        %v805 = vmul.f32 %v692, %v782
        %v806 = vmul.f32 %v694, %v782
        %v807 = vmul.f32 %v696, %v783
        %v808 = vmul.f32 %v698, %v783
        %v809 = vmul.f32 %v700, %v784
        %v810 = vmul.f32 %v702, %v784
        %v811 = vmul.f32 %v704, %v785
        %v812 = vmul.f32 %v706, %v785
        %v813 = vmul.f32 %v708, %v786
        %v814 = vmul.f32 %v710, %v786
        %v815 = vmul.f32 %v712, %v787
        %v816 = vmul.f32 %v714, %v787
        %v817 = vmul.f32 %v716, %v788
        %v818 = vmul.f32 %v718, %v788
        %v819 = vmul.f32 %v720, %v789
        %v820 = vmul.f32 %v722, %v789
        %v821 = vmul.f32 %v724, %v790
        %v822 = vmul.f32 %v726, %v790
        %v823 = vpack.c.bf16 %v793, %v791
        %v824 = vpack.c.bf16 %v794, %v792
        %v825 = vpack.c.bf16 %v797, %v795
        %v826 = vpack.c.bf16 %v798, %v796
        %v827 = vpack.c.bf16 %v801, %v799
        %v828 = vpack.c.bf16 %v802, %v800
        %v829 = vpack.c.bf16 %v805, %v803
        %v830 = vpack.c.bf16 %v806, %v804
        %v831 = vpack.c.bf16 %v809, %v807
        %v832 = vpack.c.bf16 %v810, %v808
        %v833 = vpack.c.bf16 %v813, %v811
        %v834 = vpack.c.bf16 %v814, %v812
        %v835 = vpack.c.bf16 %v817, %v815
        %v836 = vpack.c.bf16 %v818, %v816
        %v837 = vpack.c.bf16 %v821, %v819
        %v838 = vpack.c.bf16 %v822, %v820
        %839 = vmatpush.bf16.xpose.msra.mxu0 %v837
        %840 = vmatpush.bf16.xpose.msra.mxu0 %v835
        %841 = vmatpush.bf16.xpose.msra.mxu0 %v833
        %842 = vmatpush.bf16.xpose.msra.mxu0 %v831
        %843 = vmatpush.bf16.xpose.msra.mxu0 %v829
        %844 = vmatpush.bf16.xpose.msra.mxu0 %v827
        %845 = vmatpush.bf16.xpose.msra.mxu0 %v825
        %846 = vmatpush.bf16.xpose.msra.mxu0 %v823
        %847 = vmatmul.bf16.gmra.mxu0 %v396
        %v848 = vpop.f32.mrf.mxu0
        %v849 = vadd.f32 0.0, %v848
        %v850 = vpop.f32.mrf.mxu0
        %851 = vdwg.mxu0
        %852 = vmatpush.bf16.xpose.msra.mxu0 %v838
        %853 = vmatpush.bf16.xpose.msra.mxu0 %v836
        %854 = vmatpush.bf16.xpose.msra.mxu0 %v834
        %855 = vmatpush.bf16.xpose.msra.mxu0 %v832
        %856 = vmatpush.bf16.xpose.msra.mxu0 %v830
        %857 = vmatpush.bf16.xpose.msra.mxu0 %v828
        %858 = vmatpush.bf16.xpose.msra.mxu0 %v826
        %859 = vmatpush.bf16.xpose.msra.mxu0 %v824
        %860 = vmatmul.bf16.gmra.mxu0 %v397
        %v861 = vpop.f32.mrf.mxu0
        %v862 = vadd.f32 %v849, %v861
        %v863 = vpop.f32.mrf.mxu0
        %864 = vdwg.mxu0
        %865 = vst [vmem:[#allocation2] sm:$0x3] %v862
        %866 = vrot.lane.b32.xlu0 %v380, 126
        %v867 = vpop.permute.xlu0 %866
        %868 = vrot.lane.b32.xlu0 %v381, 126
        %v869 = vpop.permute.xlu0 %868
        %870 = vrot.lane.b32.xlu0 %v382, 126
        %v871 = vpop.permute.xlu0 %870
        %872 = vrot.lane.b32.xlu0 %v383, 126
        %v873 = vpop.permute.xlu0 %872
        %874 = vrot.lane.b32.xlu0 %v384, 126
        %v875 = vpop.permute.xlu0 %874
        %876 = vrot.lane.b32.xlu0 %v385, 126
        %v877 = vpop.permute.xlu0 %876
        %878 = vrot.lane.b32.xlu0 %v386, 126
        %v879 = vpop.permute.xlu0 %878
        %880 = vrot.lane.b32.xlu0 %v387, 126
        %v881 = vpop.permute.xlu0 %880
        %882 = vrot.lane.b32.xlu0 %v388, 126
        %v883 = vpop.permute.xlu0 %882
        %884 = vrot.lane.b32.xlu0 %v389, 126
        %v885 = vpop.permute.xlu0 %884
        %886 = vrot.lane.b32.xlu0 %v390, 126
        %v887 = vpop.permute.xlu0 %886
        %888 = vrot.lane.b32.xlu0 %v391, 126
        %v889 = vpop.permute.xlu0 %888
        %890 = vrot.lane.b32.xlu0 %v392, 126
        %v891 = vpop.permute.xlu0 %890
        %892 = vrot.lane.b32.xlu0 %v393, 126
        %v893 = vpop.permute.xlu0 %892
        %894 = vrot.lane.b32.xlu0 %v394, 126
        %v895 = vpop.permute.xlu0 %894
        %896 = vrot.lane.b32.xlu0 %v395, 126
        %v897 = vpop.permute.xlu0 %896
        %v898 = vrot.slane %v345, 2
        %v899 = vrot.slane %v359, 2
        %v900 = vsel %vm398, %v867, 0
        %v902 = vsel %vm398, %v869, 0
        %v904 = vsel %vm398, %v871, 0
        %v906 = vsel %vm398, %v873, 0
        %v908 = vsel %vm398, %v875, 0
        %v910 = vsel %vm398, %v877, 0
        %v912 = vsel %vm398, %v879, 0
        %v914 = vsel %vm398, %v881, 0
        %v916 = vsel %vm398, %v883, 0
        %v918 = vsel %vm398, %v885, 0
        %v920 = vsel %vm398, %v887, 0
        %v922 = vsel %vm398, %v889, 0
        %v924 = vsel %vm398, %v891, 0
        %v926 = vsel %vm398, %v893, 0
        %v928 = vsel %vm398, %v895, 0
        %v930 = vsel %vm398, %v897, 0
        %v932 = vsel %vm309, %v898, 0
        %v934 = vsel %vm309, %v899, 0
        %936 = vmatpush.msra.mxu0 0.0
        %937 = vmatpush.msra.mxu0 0.0
        %938 = vmatpush.msra.mxu0 0.0
        %939 = vmatpush.msra.mxu0 0.0
        %940 = vmatpush.msra.mxu0 0.0
        %941 = vmatpush.msra.mxu0 0.0
        %942 = vmatpush.msra.mxu0 0.0
        %943 = vmatpush.msra.mxu0 0.0
        %944 = vmatpush.msra.mxu0 0.0
        %945 = vmatpush.msra.mxu0 0.0
        %946 = vmatpush.msra.mxu0 0.0
        %947 = vmatpush.msra.mxu0 0.0
        %948 = vmatpush.msra.mxu0 0.0
        %949 = vmatpush.msra.mxu0 0.0
        %950 = vmatpush.msra.mxu0 0.0
        %951 = vmatpush.msra.mxu0 %v932
        %952 = vmatmul.f32.gmra.mxu0 %v900
        %v953 = vpop.f32.mrf.mxu0
        %v954 = vadd.f32 0.0, %v953
        %955 = vmatmul.f32.gmra.mxu0 %v902
        %v956 = vpop.f32.mrf.mxu0
        %v957 = vadd.f32 0.0, %v956
        %958 = vmatmul.f32.gmra.mxu0 %v904
        %v959 = vpop.f32.mrf.mxu0
        %v960 = vadd.f32 0.0, %v959
        %961 = vmatmul.f32.gmra.mxu0 %v906
        %v962 = vpop.f32.mrf.mxu0
        %v963 = vadd.f32 0.0, %v962
        %964 = vmatmul.f32.gmra.mxu0 %v908
        %v965 = vpop.f32.mrf.mxu0
        %v966 = vadd.f32 0.0, %v965
        %967 = vmatmul.f32.gmra.mxu0 %v910
        %v968 = vpop.f32.mrf.mxu0
        %v969 = vadd.f32 0.0, %v968
        %970 = vmatmul.f32.gmra.mxu0 %v912
        %v971 = vpop.f32.mrf.mxu0
        %v972 = vadd.f32 0.0, %v971
        %973 = vmatmul.f32.gmra.mxu0 %v914
        %v974 = vpop.f32.mrf.mxu0
        %v975 = vadd.f32 0.0, %v974
        %976 = vmatmul.f32.gmra.mxu0 %v916
        %v977 = vpop.f32.mrf.mxu0
        %v978 = vadd.f32 0.0, %v977
        %979 = vmatmul.f32.gmra.mxu0 %v918
        %v980 = vpop.f32.mrf.mxu0
        %v981 = vadd.f32 0.0, %v980
        %982 = vmatmul.f32.gmra.mxu0 %v920
        %v983 = vpop.f32.mrf.mxu0
        %v984 = vadd.f32 0.0, %v983
        %985 = vmatmul.f32.gmra.mxu0 %v922
        %v986 = vpop.f32.mrf.mxu0
        %v987 = vadd.f32 0.0, %v986
        %988 = vmatmul.f32.gmra.mxu0 %v924
        %v989 = vpop.f32.mrf.mxu0
        %v990 = vadd.f32 0.0, %v989
        %991 = vmatmul.f32.gmra.mxu0 %v926
        %v992 = vpop.f32.mrf.mxu0
        %v993 = vadd.f32 0.0, %v992
        %994 = vmatmul.f32.gmra.mxu0 %v928
        %v995 = vpop.f32.mrf.mxu0
        %v996 = vadd.f32 0.0, %v995
        %997 = vmatmul.f32.gmra.mxu0 %v930
        %v998 = vpop.f32.mrf.mxu0
        %v999 = vadd.f32 0.0, %v998
        %1000 = vdwg.mxu0
        %1001 = vmatpush.msra.mxu0 0.0
        %1002 = vmatpush.msra.mxu0 0.0
        %1003 = vmatpush.msra.mxu0 0.0
        %1004 = vmatpush.msra.mxu0 0.0
        %1005 = vmatpush.msra.mxu0 0.0
        %1006 = vmatpush.msra.mxu0 0.0
        %1007 = vmatpush.msra.mxu0 0.0
        %1008 = vmatpush.msra.mxu0 0.0
        %1009 = vmatpush.msra.mxu0 0.0
        %1010 = vmatpush.msra.mxu0 0.0
        %1011 = vmatpush.msra.mxu0 0.0
        %1012 = vmatpush.msra.mxu0 0.0
        %1013 = vmatpush.msra.mxu0 0.0
        %1014 = vmatpush.msra.mxu0 0.0
        %1015 = vmatpush.msra.mxu0 0.0
        %1016 = vmatpush.msra.mxu0 %v934
        %1017 = vmatmul.f32.gmra.mxu0 %v900
        %v1018 = vpop.f32.mrf.mxu0
        %v1019 = vadd.f32 0.0, %v1018
        %1020 = vmatmul.f32.gmra.mxu0 %v902
        %v1021 = vpop.f32.mrf.mxu0
        %v1022 = vadd.f32 0.0, %v1021
        %1023 = vmatmul.f32.gmra.mxu0 %v904
        %v1024 = vpop.f32.mrf.mxu0
        %v1025 = vadd.f32 0.0, %v1024
        %1026 = vmatmul.f32.gmra.mxu0 %v906
        %v1027 = vpop.f32.mrf.mxu0
        %v1028 = vadd.f32 0.0, %v1027
        %1029 = vmatmul.f32.gmra.mxu0 %v908
        %v1030 = vpop.f32.mrf.mxu0
        %v1031 = vadd.f32 0.0, %v1030
        %1032 = vmatmul.f32.gmra.mxu0 %v910
        %v1033 = vpop.f32.mrf.mxu0
        %v1034 = vadd.f32 0.0, %v1033
        %1035 = vmatmul.f32.gmra.mxu0 %v912
        %v1036 = vpop.f32.mrf.mxu0
        %v1037 = vadd.f32 0.0, %v1036
        %1038 = vmatmul.f32.gmra.mxu0 %v914
        %v1039 = vpop.f32.mrf.mxu0
        %v1040 = vadd.f32 0.0, %v1039
        %1041 = vmatmul.f32.gmra.mxu0 %v916
        %v1042 = vpop.f32.mrf.mxu0
        %v1043 = vadd.f32 0.0, %v1042
        %1044 = vmatmul.f32.gmra.mxu0 %v918
        %v1045 = vpop.f32.mrf.mxu0
        %v1046 = vadd.f32 0.0, %v1045
        %1047 = vmatmul.f32.gmra.mxu0 %v920
        %v1048 = vpop.f32.mrf.mxu0
        %v1049 = vadd.f32 0.0, %v1048
        %1050 = vmatmul.f32.gmra.mxu0 %v922
        %v1051 = vpop.f32.mrf.mxu0
        %v1052 = vadd.f32 0.0, %v1051
        %1053 = vmatmul.f32.gmra.mxu0 %v924
        %v1054 = vpop.f32.mrf.mxu0
        %v1055 = vadd.f32 0.0, %v1054
        %1056 = vmatmul.f32.gmra.mxu0 %v926
        %v1057 = vpop.f32.mrf.mxu0
        %v1058 = vadd.f32 0.0, %v1057
        %1059 = vmatmul.f32.gmra.mxu0 %v928
        %v1060 = vpop.f32.mrf.mxu0
        %v1061 = vadd.f32 0.0, %v1060
        %1062 = vmatmul.f32.gmra.mxu0 %v930
        %v1063 = vpop.f32.mrf.mxu0
        %v1064 = vadd.f32 0.0, %v1063
        %1065 = vdwg.mxu0
        %v1066 = vmax.f32 %v954, %v1019
        %1067 = vmax.xlane.f32.xlu0 %v1066
        %v1068 = vpop.xlane.xlu0 %1067
        %v1069 = vmax.f32 %v957, %v1022
        %1070 = vmax.xlane.f32.xlu0 %v1069
        %v1071 = vpop.xlane.xlu0 %1070
        %v1072 = vmax.f32 %v960, %v1025
        %1073 = vmax.xlane.f32.xlu0 %v1072
        %v1074 = vpop.xlane.xlu0 %1073
        %v1075 = vmax.f32 %v963, %v1028
        %1076 = vmax.xlane.f32.xlu0 %v1075
        %v1077 = vpop.xlane.xlu0 %1076
        %v1078 = vmax.f32 %v966, %v1031
        %1079 = vmax.xlane.f32.xlu0 %v1078
        %v1080 = vpop.xlane.xlu0 %1079
        %v1081 = vmax.f32 %v969, %v1034
        %1082 = vmax.xlane.f32.xlu0 %v1081
        %v1083 = vpop.xlane.xlu0 %1082
        %v1084 = vmax.f32 %v972, %v1037
        %1085 = vmax.xlane.f32.xlu0 %v1084
        %v1086 = vpop.xlane.xlu0 %1085
        %v1087 = vmax.f32 %v975, %v1040
        %1088 = vmax.xlane.f32.xlu0 %v1087
        %v1089 = vpop.xlane.xlu0 %1088
        %v1090 = vmax.f32 %v978, %v1043
        %1091 = vmax.xlane.f32.xlu0 %v1090
        %v1092 = vpop.xlane.xlu0 %1091
        %v1093 = vmax.f32 %v981, %v1046
        %1094 = vmax.xlane.f32.xlu0 %v1093
        %v1095 = vpop.xlane.xlu0 %1094
        %v1096 = vmax.f32 %v984, %v1049
        %1097 = vmax.xlane.f32.xlu0 %v1096
        %v1098 = vpop.xlane.xlu0 %1097
        %v1099 = vmax.f32 %v987, %v1052
        %1100 = vmax.xlane.f32.xlu0 %v1099
        %v1101 = vpop.xlane.xlu0 %1100
        %v1102 = vmax.f32 %v990, %v1055
        %1103 = vmax.xlane.f32.xlu0 %v1102
        %v1104 = vpop.xlane.xlu0 %1103
        %v1105 = vmax.f32 %v993, %v1058
        %1106 = vmax.xlane.f32.xlu0 %v1105
        %v1107 = vpop.xlane.xlu0 %1106
        %v1108 = vmax.f32 %v996, %v1061
        %1109 = vmax.xlane.f32.xlu0 %v1108
        %v1110 = vpop.xlane.xlu0 %1109
        %v1111 = vmax.f32 %v999, %v1064
        %1112 = vmax.xlane.f32.xlu0 %v1111
        %v1113 = vpop.xlane.xlu0 %1112
        %v1114 = vsub.f32 %v954, %v1068
        %v1115 = vsub.f32 %v1019, %v1068
        %v1116 = vsub.f32 %v957, %v1071
        %v1117 = vsub.f32 %v1022, %v1071
        %v1118 = vsub.f32 %v960, %v1074
        %v1119 = vsub.f32 %v1025, %v1074
        %v1120 = vsub.f32 %v963, %v1077
        %v1121 = vsub.f32 %v1028, %v1077
        %v1122 = vsub.f32 %v966, %v1080
        %v1123 = vsub.f32 %v1031, %v1080
        %v1124 = vsub.f32 %v969, %v1083
        %v1125 = vsub.f32 %v1034, %v1083
        %v1126 = vsub.f32 %v972, %v1086
        %v1127 = vsub.f32 %v1037, %v1086
        %v1128 = vsub.f32 %v975, %v1089
        %v1129 = vsub.f32 %v1040, %v1089
        %v1130 = vsub.f32 %v978, %v1092
        %v1131 = vsub.f32 %v1043, %v1092
        %v1132 = vsub.f32 %v981, %v1095
        %v1133 = vsub.f32 %v1046, %v1095
        %v1134 = vsub.f32 %v984, %v1098
        %v1135 = vsub.f32 %v1049, %v1098
        %v1136 = vsub.f32 %v987, %v1101
        %v1137 = vsub.f32 %v1052, %v1101
        %v1138 = vsub.f32 %v990, %v1104
        %v1139 = vsub.f32 %v1055, %v1104
        %v1140 = vsub.f32 %v993, %v1107
        %v1141 = vsub.f32 %v1058, %v1107
        %v1142 = vsub.f32 %v996, %v1110
        %v1143 = vsub.f32 %v1061, %v1110
        %v1144 = vsub.f32 %v999, %v1113
        %v1145 = vsub.f32 %v1064, %v1113
        %v1146 = vmul.f32 %v1114, 1.442695
        %v1147 = vpow.pop %v1146
        %v1148 = vmul.f32 %v1115, 1.442695
        %v1149 = vpow.pop %v1148
        %v1150 = vmul.f32 %v1116, 1.442695
        %v1151 = vpow.pop %v1150
        %v1152 = vmul.f32 %v1117, 1.442695
        %v1153 = vpow.pop %v1152
        %v1154 = vmul.f32 %v1118, 1.442695
        %v1155 = vpow.pop %v1154
        %v1156 = vmul.f32 %v1119, 1.442695
        %v1157 = vpow.pop %v1156
        %v1158 = vmul.f32 %v1120, 1.442695
        %v1159 = vpow.pop %v1158
        %v1160 = vmul.f32 %v1121, 1.442695
        %v1161 = vpow.pop %v1160
        %v1162 = vmul.f32 %v1122, 1.442695
        %v1163 = vpow.pop %v1162
        %v1164 = vmul.f32 %v1123, 1.442695
        %v1165 = vpow.pop %v1164
        %v1166 = vmul.f32 %v1124, 1.442695
        %v1167 = vpow.pop %v1166
        %v1168 = vmul.f32 %v1125, 1.442695
        %v1169 = vpow.pop %v1168
        %v1170 = vmul.f32 %v1126, 1.442695
        %v1171 = vpow.pop %v1170
        %v1172 = vmul.f32 %v1127, 1.442695
        %v1173 = vpow.pop %v1172
        %v1174 = vmul.f32 %v1128, 1.442695
        %v1175 = vpow.pop %v1174
        %v1176 = vmul.f32 %v1129, 1.442695
        %v1177 = vpow.pop %v1176
        %v1178 = vmul.f32 %v1130, 1.442695
        %v1179 = vpow.pop %v1178
        %v1180 = vmul.f32 %v1131, 1.442695
        %v1181 = vpow.pop %v1180
        %v1182 = vmul.f32 %v1132, 1.442695
        %v1183 = vpow.pop %v1182
        %v1184 = vmul.f32 %v1133, 1.442695
        %v1185 = vpow.pop %v1184
        %v1186 = vmul.f32 %v1134, 1.442695
        %v1187 = vpow.pop %v1186
        %v1188 = vmul.f32 %v1135, 1.442695
        %v1189 = vpow.pop %v1188
        %v1190 = vmul.f32 %v1136, 1.442695
        %v1191 = vpow.pop %v1190
        %v1192 = vmul.f32 %v1137, 1.442695
        %v1193 = vpow.pop %v1192
        %v1194 = vmul.f32 %v1138, 1.442695
        %v1195 = vpow.pop %v1194
        %v1196 = vmul.f32 %v1139, 1.442695
        %v1197 = vpow.pop %v1196
        %v1198 = vmul.f32 %v1140, 1.442695
        %v1199 = vpow.pop %v1198
        %v1200 = vmul.f32 %v1141, 1.442695
        %v1201 = vpow.pop %v1200
        %v1202 = vmul.f32 %v1142, 1.442695
        %v1203 = vpow.pop %v1202
        %v1204 = vmul.f32 %v1143, 1.442695
        %v1205 = vpow.pop %v1204
        %v1206 = vmul.f32 %v1144, 1.442695
        %v1207 = vpow.pop %v1206
        %v1208 = vmul.f32 %v1145, 1.442695
        %v1209 = vpow.pop %v1208
        %v1210 = vadd.f32 %v1147, %v1149
        %1211 = vadd.xlane.f32.xlu0 %v1210
        %v1212 = vpop.xlane.xlu0 %1211
        %v1213 = vadd.f32 %v1151, %v1153
        %1214 = vadd.xlane.f32.xlu0 %v1213
        %v1215 = vpop.xlane.xlu0 %1214
        %v1216 = vadd.f32 %v1155, %v1157
        %1217 = vadd.xlane.f32.xlu0 %v1216
        %v1218 = vpop.xlane.xlu0 %1217
        %v1219 = vadd.f32 %v1159, %v1161
        %1220 = vadd.xlane.f32.xlu0 %v1219
        %v1221 = vpop.xlane.xlu0 %1220
        %v1222 = vadd.f32 %v1163, %v1165
        %1223 = vadd.xlane.f32.xlu0 %v1222
        %v1224 = vpop.xlane.xlu0 %1223
        %v1225 = vadd.f32 %v1167, %v1169
        %1226 = vadd.xlane.f32.xlu0 %v1225
        %v1227 = vpop.xlane.xlu0 %1226
        %v1228 = vadd.f32 %v1171, %v1173
        %1229 = vadd.xlane.f32.xlu0 %v1228
        %v1230 = vpop.xlane.xlu0 %1229
        %v1231 = vadd.f32 %v1175, %v1177
        %1232 = vadd.xlane.f32.xlu0 %v1231
        %v1233 = vpop.xlane.xlu0 %1232
        %v1234 = vadd.f32 %v1179, %v1181
        %1235 = vadd.xlane.f32.xlu0 %v1234
        %v1236 = vpop.xlane.xlu0 %1235
        %v1237 = vadd.f32 %v1183, %v1185
        %1238 = vadd.xlane.f32.xlu0 %v1237
        %v1239 = vpop.xlane.xlu0 %1238
        %v1240 = vadd.f32 %v1187, %v1189
        %1241 = vadd.xlane.f32.xlu0 %v1240
        %v1242 = vpop.xlane.xlu0 %1241
        %v1243 = vadd.f32 %v1191, %v1193
        %1244 = vadd.xlane.f32.xlu0 %v1243
        %v1245 = vpop.xlane.xlu0 %1244
        %v1246 = vadd.f32 %v1195, %v1197
        %1247 = vadd.xlane.f32.xlu0 %v1246
        %v1248 = vpop.xlane.xlu0 %1247
        %v1249 = vadd.f32 %v1199, %v1201
        %1250 = vadd.xlane.f32.xlu0 %v1249
        %v1251 = vpop.xlane.xlu0 %1250
        %v1252 = vadd.f32 %v1203, %v1205
        %1253 = vadd.xlane.f32.xlu0 %v1252
        %v1254 = vpop.xlane.xlu0 %1253
        %v1255 = vadd.f32 %v1207, %v1209
        %1256 = vadd.xlane.f32.xlu0 %v1255
        %v1257 = vpop.xlane.xlu0 %1256
        %v1258 = vrcp.pop %v1212
        %v1259 = vrcp.pop %v1215
        %v1260 = vrcp.pop %v1218
        %v1261 = vrcp.pop %v1221
        %v1262 = vrcp.pop %v1224
        %v1263 = vrcp.pop %v1227
        %v1264 = vrcp.pop %v1230
        %v1265 = vrcp.pop %v1233
        %v1266 = vrcp.pop %v1236
        %v1267 = vrcp.pop %v1239
        %v1268 = vrcp.pop %v1242
        %v1269 = vrcp.pop %v1245
        %v1270 = vrcp.pop %v1248
        %v1271 = vrcp.pop %v1251
        %v1272 = vrcp.pop %v1254
        %v1273 = vrcp.pop %v1257
        %v1274 = vmul.f32 %v1147, %v1258
        %v1275 = vmul.f32 %v1149, %v1258
        %v1276 = vmul.f32 %v1151, %v1259
        %v1277 = vmul.f32 %v1153, %v1259
        %v1278 = vmul.f32 %v1155, %v1260
        %v1279 = vmul.f32 %v1157, %v1260
        %v1280 = vmul.f32 %v1159, %v1261
        %v1281 = vmul.f32 %v1161, %v1261
        %v1282 = vmul.f32 %v1163, %v1262
        %v1283 = vmul.f32 %v1165, %v1262
        %v1284 = vmul.f32 %v1167, %v1263
        %v1285 = vmul.f32 %v1169, %v1263
        %v1286 = vmul.f32 %v1171, %v1264
        %v1287 = vmul.f32 %v1173, %v1264
        %v1288 = vmul.f32 %v1175, %v1265
        %v1289 = vmul.f32 %v1177, %v1265
        %v1290 = vmul.f32 %v1179, %v1266
        %v1291 = vmul.f32 %v1181, %v1266
        %v1292 = vmul.f32 %v1183, %v1267
        %v1293 = vmul.f32 %v1185, %v1267
        %v1294 = vmul.f32 %v1187, %v1268
        %v1295 = vmul.f32 %v1189, %v1268
        %v1296 = vmul.f32 %v1191, %v1269
        %v1297 = vmul.f32 %v1193, %v1269
        %v1298 = vmul.f32 %v1195, %v1270
        %v1299 = vmul.f32 %v1197, %v1270
        %v1300 = vmul.f32 %v1199, %v1271
        %v1301 = vmul.f32 %v1201, %v1271
        %v1302 = vmul.f32 %v1203, %v1272
        %v1303 = vmul.f32 %v1205, %v1272
        %v1304 = vmul.f32 %v1207, %v1273
        %v1305 = vmul.f32 %v1209, %v1273
        %v1306 = vpack.c.bf16 %v1276, %v1274
        %v1307 = vpack.c.bf16 %v1277, %v1275
        %v1308 = vpack.c.bf16 %v1280, %v1278
        %v1309 = vpack.c.bf16 %v1281, %v1279
        %v1310 = vpack.c.bf16 %v1284, %v1282
        %v1311 = vpack.c.bf16 %v1285, %v1283
        %v1312 = vpack.c.bf16 %v1288, %v1286
        %v1313 = vpack.c.bf16 %v1289, %v1287
        %v1314 = vpack.c.bf16 %v1292, %v1290
        %v1315 = vpack.c.bf16 %v1293, %v1291
        %v1316 = vpack.c.bf16 %v1296, %v1294
        %v1317 = vpack.c.bf16 %v1297, %v1295
        %v1318 = vpack.c.bf16 %v1300, %v1298
        %v1319 = vpack.c.bf16 %v1301, %v1299
        %v1320 = vpack.c.bf16 %v1304, %v1302
        %v1321 = vpack.c.bf16 %v1305, %v1303
        %v1324 = vrot.slane %v396, 1
        %v1325 = vrot.slane %v397, 1
        %1328 = vmatpush.bf16.xpose.msra.mxu0 %v1320
        %1329 = vmatpush.bf16.xpose.msra.mxu0 %v1318
        %1330 = vmatpush.bf16.xpose.msra.mxu0 %v1316
        %1331 = vmatpush.bf16.xpose.msra.mxu0 %v1314
        %1332 = vmatpush.bf16.xpose.msra.mxu0 %v1312
        %1333 = vmatpush.bf16.xpose.msra.mxu0 %v1310
        %1334 = vmatpush.bf16.xpose.msra.mxu0 %v1308
        %1335 = vmatpush.bf16.xpose.msra.mxu0 %v1306
        %1336 = vmatmul.bf16.gmra.mxu0 %v1324
        %v1337 = vpop.f32.mrf.mxu0
        %v1338 = vadd.f32 0.0, %v1337
        %v1339 = vpop.f32.mrf.mxu0
        %1340 = vdwg.mxu0
        %1341 = vmatpush.bf16.xpose.msra.mxu0 %v1321
        %1342 = vmatpush.bf16.xpose.msra.mxu0 %v1319
        %1343 = vmatpush.bf16.xpose.msra.mxu0 %v1317
        %1344 = vmatpush.bf16.xpose.msra.mxu0 %v1315
        %1345 = vmatpush.bf16.xpose.msra.mxu0 %v1313
        %1346 = vmatpush.bf16.xpose.msra.mxu0 %v1311
        %1347 = vmatpush.bf16.xpose.msra.mxu0 %v1309
        %1348 = vmatpush.bf16.xpose.msra.mxu0 %v1307
        %1349 = vmatmul.bf16.gmra.mxu0 %v1325
        %v1350 = vpop.f32.mrf.mxu0
        %v1351 = vadd.f32 %v1338, %v1350
        %v1352 = vpop.f32.mrf.mxu0
        %1353 = vdwg.mxu0
        %1354 = vst [vmem:[#allocation2 + $0x2] sm:$0x3] %v1351
        %1355 = vrot.lane.b32.xlu0 %v380, 124
        %v1356 = vpop.permute.xlu0 %1355
        %1357 = vrot.lane.b32.xlu0 %v381, 124
        %v1358 = vpop.permute.xlu0 %1357
        %1359 = vrot.lane.b32.xlu0 %v382, 124
        %v1360 = vpop.permute.xlu0 %1359
        %1361 = vrot.lane.b32.xlu0 %v383, 124
        %v1362 = vpop.permute.xlu0 %1361
        %1363 = vrot.lane.b32.xlu0 %v384, 124
        %v1364 = vpop.permute.xlu0 %1363
        %1365 = vrot.lane.b32.xlu0 %v385, 124
        %v1366 = vpop.permute.xlu0 %1365
        %1367 = vrot.lane.b32.xlu0 %v386, 124
        %v1368 = vpop.permute.xlu0 %1367
        %1369 = vrot.lane.b32.xlu0 %v387, 124
        %v1370 = vpop.permute.xlu0 %1369
        %1371 = vrot.lane.b32.xlu0 %v388, 124
        %v1372 = vpop.permute.xlu0 %1371
        %1373 = vrot.lane.b32.xlu0 %v389, 124
        %v1374 = vpop.permute.xlu0 %1373
        %1375 = vrot.lane.b32.xlu0 %v390, 124
        %v1376 = vpop.permute.xlu0 %1375
        %1377 = vrot.lane.b32.xlu0 %v391, 124
        %v1378 = vpop.permute.xlu0 %1377
        %1379 = vrot.lane.b32.xlu0 %v392, 124
        %v1380 = vpop.permute.xlu0 %1379
        %1381 = vrot.lane.b32.xlu0 %v393, 124
        %v1382 = vpop.permute.xlu0 %1381
        %1383 = vrot.lane.b32.xlu0 %v394, 124
        %v1384 = vpop.permute.xlu0 %1383
        %1385 = vrot.lane.b32.xlu0 %v395, 124
        %v1386 = vpop.permute.xlu0 %1385
        %v1387 = vrot.slane %v345, 4
        %v1388 = vrot.slane %v359, 4
        %v1389 = vsel %vm398, %v1356, 0
        %v1391 = vsel %vm398, %v1358, 0
        %v1393 = vsel %vm398, %v1360, 0
        %v1395 = vsel %vm398, %v1362, 0
        %v1397 = vsel %vm398, %v1364, 0
        %v1399 = vsel %vm398, %v1366, 0
        %v1401 = vsel %vm398, %v1368, 0
        %v1403 = vsel %vm398, %v1370, 0
        %v1405 = vsel %vm398, %v1372, 0
        %v1407 = vsel %vm398, %v1374, 0
        %v1409 = vsel %vm398, %v1376, 0
        %v1411 = vsel %vm398, %v1378, 0
        %v1413 = vsel %vm398, %v1380, 0
        %v1415 = vsel %vm398, %v1382, 0
        %v1417 = vsel %vm398, %v1384, 0
        %v1419 = vsel %vm398, %v1386, 0
        %v1421 = vsel %vm309, %v1387, 0
        %v1423 = vsel %vm309, %v1388, 0
        %1425 = vmatpush.msra.mxu0 0.0
        %1426 = vmatpush.msra.mxu0 0.0
        %1427 = vmatpush.msra.mxu0 0.0
        %1428 = vmatpush.msra.mxu0 0.0
        %1429 = vmatpush.msra.mxu0 0.0
        %1430 = vmatpush.msra.mxu0 0.0
        %1431 = vmatpush.msra.mxu0 0.0
        %1432 = vmatpush.msra.mxu0 0.0
        %1433 = vmatpush.msra.mxu0 0.0
        %1434 = vmatpush.msra.mxu0 0.0
        %1435 = vmatpush.msra.mxu0 0.0
        %1436 = vmatpush.msra.mxu0 0.0
        %1437 = vmatpush.msra.mxu0 0.0
        %1438 = vmatpush.msra.mxu0 0.0
        %1439 = vmatpush.msra.mxu0 0.0
        %1440 = vmatpush.msra.mxu0 %v1421
        %1441 = vmatmul.f32.gmra.mxu0 %v1389
        %v1442 = vpop.f32.mrf.mxu0
        %v1443 = vadd.f32 0.0, %v1442
        %1444 = vmatmul.f32.gmra.mxu0 %v1391
        %v1445 = vpop.f32.mrf.mxu0
        %v1446 = vadd.f32 0.0, %v1445
        %1447 = vmatmul.f32.gmra.mxu0 %v1393
        %v1448 = vpop.f32.mrf.mxu0
        %v1449 = vadd.f32 0.0, %v1448
        %1450 = vmatmul.f32.gmra.mxu0 %v1395
        %v1451 = vpop.f32.mrf.mxu0
        %v1452 = vadd.f32 0.0, %v1451
        %1453 = vmatmul.f32.gmra.mxu0 %v1397
        %v1454 = vpop.f32.mrf.mxu0
        %v1455 = vadd.f32 0.0, %v1454
        %1456 = vmatmul.f32.gmra.mxu0 %v1399
        %v1457 = vpop.f32.mrf.mxu0
        %v1458 = vadd.f32 0.0, %v1457
        %1459 = vmatmul.f32.gmra.mxu0 %v1401
        %v1460 = vpop.f32.mrf.mxu0
        %v1461 = vadd.f32 0.0, %v1460
        %1462 = vmatmul.f32.gmra.mxu0 %v1403
        %v1463 = vpop.f32.mrf.mxu0
        %v1464 = vadd.f32 0.0, %v1463
        %1465 = vmatmul.f32.gmra.mxu0 %v1405
        %v1466 = vpop.f32.mrf.mxu0
        %v1467 = vadd.f32 0.0, %v1466
        %1468 = vmatmul.f32.gmra.mxu0 %v1407
        %v1469 = vpop.f32.mrf.mxu0
        %v1470 = vadd.f32 0.0, %v1469
        %1471 = vmatmul.f32.gmra.mxu0 %v1409
        %v1472 = vpop.f32.mrf.mxu0
        %v1473 = vadd.f32 0.0, %v1472
        %1474 = vmatmul.f32.gmra.mxu0 %v1411
        %v1475 = vpop.f32.mrf.mxu0
        %v1476 = vadd.f32 0.0, %v1475
        %1477 = vmatmul.f32.gmra.mxu0 %v1413
        %v1478 = vpop.f32.mrf.mxu0
        %v1479 = vadd.f32 0.0, %v1478
        %1480 = vmatmul.f32.gmra.mxu0 %v1415
        %v1481 = vpop.f32.mrf.mxu0
        %v1482 = vadd.f32 0.0, %v1481
        %1483 = vmatmul.f32.gmra.mxu0 %v1417
        %v1484 = vpop.f32.mrf.mxu0
        %v1485 = vadd.f32 0.0, %v1484
        %1486 = vmatmul.f32.gmra.mxu0 %v1419
        %v1487 = vpop.f32.mrf.mxu0
        %v1488 = vadd.f32 0.0, %v1487
        %1489 = vdwg.mxu0
        %1490 = vmatpush.msra.mxu0 0.0
        %1491 = vmatpush.msra.mxu0 0.0
        %1492 = vmatpush.msra.mxu0 0.0
        %1493 = vmatpush.msra.mxu0 0.0
        %1494 = vmatpush.msra.mxu0 0.0
        %1495 = vmatpush.msra.mxu0 0.0
        %1496 = vmatpush.msra.mxu0 0.0
        %1497 = vmatpush.msra.mxu0 0.0
        %1498 = vmatpush.msra.mxu0 0.0
        %1499 = vmatpush.msra.mxu0 0.0
        %1500 = vmatpush.msra.mxu0 0.0
        %1501 = vmatpush.msra.mxu0 0.0
        %1502 = vmatpush.msra.mxu0 0.0
        %1503 = vmatpush.msra.mxu0 0.0
        %1504 = vmatpush.msra.mxu0 0.0
        %1505 = vmatpush.msra.mxu0 %v1423
        %1506 = vmatmul.f32.gmra.mxu0 %v1389
        %v1507 = vpop.f32.mrf.mxu0
        %v1508 = vadd.f32 0.0, %v1507
        %1509 = vmatmul.f32.gmra.mxu0 %v1391
        %v1510 = vpop.f32.mrf.mxu0
        %v1511 = vadd.f32 0.0, %v1510
        %1512 = vmatmul.f32.gmra.mxu0 %v1393
        %v1513 = vpop.f32.mrf.mxu0
        %v1514 = vadd.f32 0.0, %v1513
        %1515 = vmatmul.f32.gmra.mxu0 %v1395
        %v1516 = vpop.f32.mrf.mxu0
        %v1517 = vadd.f32 0.0, %v1516
        %1518 = vmatmul.f32.gmra.mxu0 %v1397
        %v1519 = vpop.f32.mrf.mxu0
        %v1520 = vadd.f32 0.0, %v1519
        %1521 = vmatmul.f32.gmra.mxu0 %v1399
        %v1522 = vpop.f32.mrf.mxu0
        %v1523 = vadd.f32 0.0, %v1522
        %1524 = vmatmul.f32.gmra.mxu0 %v1401
        %v1525 = vpop.f32.mrf.mxu0
        %v1526 = vadd.f32 0.0, %v1525
        %1527 = vmatmul.f32.gmra.mxu0 %v1403
        %v1528 = vpop.f32.mrf.mxu0
        %v1529 = vadd.f32 0.0, %v1528
        %1530 = vmatmul.f32.gmra.mxu0 %v1405
        %v1531 = vpop.f32.mrf.mxu0
        %v1532 = vadd.f32 0.0, %v1531
        %1533 = vmatmul.f32.gmra.mxu0 %v1407
        %v1534 = vpop.f32.mrf.mxu0
        %v1535 = vadd.f32 0.0, %v1534
        %1536 = vmatmul.f32.gmra.mxu0 %v1409
        %v1537 = vpop.f32.mrf.mxu0
        %v1538 = vadd.f32 0.0, %v1537
        %1539 = vmatmul.f32.gmra.mxu0 %v1411
        %v1540 = vpop.f32.mrf.mxu0
        %v1541 = vadd.f32 0.0, %v1540
        %1542 = vmatmul.f32.gmra.mxu0 %v1413
        %v1543 = vpop.f32.mrf.mxu0
        %v1544 = vadd.f32 0.0, %v1543
        %1545 = vmatmul.f32.gmra.mxu0 %v1415
        %v1546 = vpop.f32.mrf.mxu0
        %v1547 = vadd.f32 0.0, %v1546
        %1548 = vmatmul.f32.gmra.mxu0 %v1417
        %v1549 = vpop.f32.mrf.mxu0
        %v1550 = vadd.f32 0.0, %v1549
        %1551 = vmatmul.f32.gmra.mxu0 %v1419
        %v1552 = vpop.f32.mrf.mxu0
        %v1553 = vadd.f32 0.0, %v1552
        %1554 = vdwg.mxu0
        %v1555 = vmax.f32 %v1443, %v1508
        %1556 = vmax.xlane.f32.xlu0 %v1555
        %v1557 = vpop.xlane.xlu0 %1556
        %v1558 = vmax.f32 %v1446, %v1511
        %1559 = vmax.xlane.f32.xlu0 %v1558
        %v1560 = vpop.xlane.xlu0 %1559
        %v1561 = vmax.f32 %v1449, %v1514
        %1562 = vmax.xlane.f32.xlu0 %v1561
        %v1563 = vpop.xlane.xlu0 %1562
        %v1564 = vmax.f32 %v1452, %v1517
        %1565 = vmax.xlane.f32.xlu0 %v1564
        %v1566 = vpop.xlane.xlu0 %1565
        %v1567 = vmax.f32 %v1455, %v1520
        %1568 = vmax.xlane.f32.xlu0 %v1567
        %v1569 = vpop.xlane.xlu0 %1568
        %v1570 = vmax.f32 %v1458, %v1523
        %1571 = vmax.xlane.f32.xlu0 %v1570
        %v1572 = vpop.xlane.xlu0 %1571
        %v1573 = vmax.f32 %v1461, %v1526
        %1574 = vmax.xlane.f32.xlu0 %v1573
        %v1575 = vpop.xlane.xlu0 %1574
        %v1576 = vmax.f32 %v1464, %v1529
        %1577 = vmax.xlane.f32.xlu0 %v1576
        %v1578 = vpop.xlane.xlu0 %1577
        %v1579 = vmax.f32 %v1467, %v1532
        %1580 = vmax.xlane.f32.xlu0 %v1579
        %v1581 = vpop.xlane.xlu0 %1580
        %v1582 = vmax.f32 %v1470, %v1535
        %1583 = vmax.xlane.f32.xlu0 %v1582
        %v1584 = vpop.xlane.xlu0 %1583
        %v1585 = vmax.f32 %v1473, %v1538
        %1586 = vmax.xlane.f32.xlu0 %v1585
        %v1587 = vpop.xlane.xlu0 %1586
        %v1588 = vmax.f32 %v1476, %v1541
        %1589 = vmax.xlane.f32.xlu0 %v1588
        %v1590 = vpop.xlane.xlu0 %1589
        %v1591 = vmax.f32 %v1479, %v1544
        %1592 = vmax.xlane.f32.xlu0 %v1591
        %v1593 = vpop.xlane.xlu0 %1592
        %v1594 = vmax.f32 %v1482, %v1547
        %1595 = vmax.xlane.f32.xlu0 %v1594
        %v1596 = vpop.xlane.xlu0 %1595
        %v1597 = vmax.f32 %v1485, %v1550
        %1598 = vmax.xlane.f32.xlu0 %v1597
        %v1599 = vpop.xlane.xlu0 %1598
        %v1600 = vmax.f32 %v1488, %v1553
        %1601 = vmax.xlane.f32.xlu0 %v1600
        %v1602 = vpop.xlane.xlu0 %1601
        %v1603 = vsub.f32 %v1443, %v1557
        %v1604 = vsub.f32 %v1508, %v1557
        %v1605 = vsub.f32 %v1446, %v1560
        %v1606 = vsub.f32 %v1511, %v1560
        %v1607 = vsub.f32 %v1449, %v1563
        %v1608 = vsub.f32 %v1514, %v1563
        %v1609 = vsub.f32 %v1452, %v1566
        %v1610 = vsub.f32 %v1517, %v1566
        %v1611 = vsub.f32 %v1455, %v1569
        %v1612 = vsub.f32 %v1520, %v1569
        %v1613 = vsub.f32 %v1458, %v1572
        %v1614 = vsub.f32 %v1523, %v1572
        %v1615 = vsub.f32 %v1461, %v1575
        %v1616 = vsub.f32 %v1526, %v1575
        %v1617 = vsub.f32 %v1464, %v1578
        %v1618 = vsub.f32 %v1529, %v1578
        %v1619 = vsub.f32 %v1467, %v1581
        %v1620 = vsub.f32 %v1532, %v1581
        %v1621 = vsub.f32 %v1470, %v1584
        %v1622 = vsub.f32 %v1535, %v1584
        %v1623 = vsub.f32 %v1473, %v1587
        %v1624 = vsub.f32 %v1538, %v1587
        %v1625 = vsub.f32 %v1476, %v1590
        %v1626 = vsub.f32 %v1541, %v1590
        %v1627 = vsub.f32 %v1479, %v1593
        %v1628 = vsub.f32 %v1544, %v1593
        %v1629 = vsub.f32 %v1482, %v1596
        %v1630 = vsub.f32 %v1547, %v1596
        %v1631 = vsub.f32 %v1485, %v1599
        %v1632 = vsub.f32 %v1550, %v1599
        %v1633 = vsub.f32 %v1488, %v1602
        %v1634 = vsub.f32 %v1553, %v1602
        %v1635 = vmul.f32 %v1603, 1.442695
        %v1636 = vpow.pop %v1635
        %v1637 = vmul.f32 %v1604, 1.442695
        %v1638 = vpow.pop %v1637
        %v1639 = vmul.f32 %v1605, 1.442695
        %v1640 = vpow.pop %v1639
        %v1641 = vmul.f32 %v1606, 1.442695
        %v1642 = vpow.pop %v1641
        %v1643 = vmul.f32 %v1607, 1.442695
        %v1644 = vpow.pop %v1643
        %v1645 = vmul.f32 %v1608, 1.442695
        %v1646 = vpow.pop %v1645
        %v1647 = vmul.f32 %v1609, 1.442695
        %v1648 = vpow.pop %v1647
        %v1649 = vmul.f32 %v1610, 1.442695
        %v1650 = vpow.pop %v1649
        %v1651 = vmul.f32 %v1611, 1.442695
        %v1652 = vpow.pop %v1651
        %v1653 = vmul.f32 %v1612, 1.442695
        %v1654 = vpow.pop %v1653
        %v1655 = vmul.f32 %v1613, 1.442695
        %v1656 = vpow.pop %v1655
        %v1657 = vmul.f32 %v1614, 1.442695
        %v1658 = vpow.pop %v1657
        %v1659 = vmul.f32 %v1615, 1.442695
        %v1660 = vpow.pop %v1659
        %v1661 = vmul.f32 %v1616, 1.442695
        %v1662 = vpow.pop %v1661
        %v1663 = vmul.f32 %v1617, 1.442695
        %v1664 = vpow.pop %v1663
        %v1665 = vmul.f32 %v1618, 1.442695
        %v1666 = vpow.pop %v1665
        %v1667 = vmul.f32 %v1619, 1.442695
        %v1668 = vpow.pop %v1667
        %v1669 = vmul.f32 %v1620, 1.442695
        %v1670 = vpow.pop %v1669
        %v1671 = vmul.f32 %v1621, 1.442695
        %v1672 = vpow.pop %v1671
        %v1673 = vmul.f32 %v1622, 1.442695
        %v1674 = vpow.pop %v1673
        %v1675 = vmul.f32 %v1623, 1.442695
        %v1676 = vpow.pop %v1675
        %v1677 = vmul.f32 %v1624, 1.442695
        %v1678 = vpow.pop %v1677
        %v1679 = vmul.f32 %v1625, 1.442695
        %v1680 = vpow.pop %v1679
        %v1681 = vmul.f32 %v1626, 1.442695
        %v1682 = vpow.pop %v1681
        %v1683 = vmul.f32 %v1627, 1.442695
        %v1684 = vpow.pop %v1683
        %v1685 = vmul.f32 %v1628, 1.442695
        %v1686 = vpow.pop %v1685
        %v1687 = vmul.f32 %v1629, 1.442695
        %v1688 = vpow.pop %v1687
        %v1689 = vmul.f32 %v1630, 1.442695
        %v1690 = vpow.pop %v1689
        %v1691 = vmul.f32 %v1631, 1.442695
        %v1692 = vpow.pop %v1691
        %v1693 = vmul.f32 %v1632, 1.442695
        %v1694 = vpow.pop %v1693
        %v1695 = vmul.f32 %v1633, 1.442695
        %v1696 = vpow.pop %v1695
        %v1697 = vmul.f32 %v1634, 1.442695
        %v1698 = vpow.pop %v1697
        %v1699 = vadd.f32 %v1636, %v1638
        %1700 = vadd.xlane.f32.xlu0 %v1699
        %v1701 = vpop.xlane.xlu0 %1700
        %v1702 = vadd.f32 %v1640, %v1642
        %1703 = vadd.xlane.f32.xlu0 %v1702
        %v1704 = vpop.xlane.xlu0 %1703
        %v1705 = vadd.f32 %v1644, %v1646
        %1706 = vadd.xlane.f32.xlu0 %v1705
        %v1707 = vpop.xlane.xlu0 %1706
        %v1708 = vadd.f32 %v1648, %v1650
        %1709 = vadd.xlane.f32.xlu0 %v1708
        %v1710 = vpop.xlane.xlu0 %1709
        %v1711 = vadd.f32 %v1652, %v1654
        %1712 = vadd.xlane.f32.xlu0 %v1711
        %v1713 = vpop.xlane.xlu0 %1712
        %v1714 = vadd.f32 %v1656, %v1658
        %1715 = vadd.xlane.f32.xlu0 %v1714
        %v1716 = vpop.xlane.xlu0 %1715
        %v1717 = vadd.f32 %v1660, %v1662
        %1718 = vadd.xlane.f32.xlu0 %v1717
        %v1719 = vpop.xlane.xlu0 %1718
        %v1720 = vadd.f32 %v1664, %v1666
        %1721 = vadd.xlane.f32.xlu0 %v1720
        %v1722 = vpop.xlane.xlu0 %1721
        %v1723 = vadd.f32 %v1668, %v1670
        %1724 = vadd.xlane.f32.xlu0 %v1723
        %v1725 = vpop.xlane.xlu0 %1724
        %v1726 = vadd.f32 %v1672, %v1674
        %1727 = vadd.xlane.f32.xlu0 %v1726
        %v1728 = vpop.xlane.xlu0 %1727
        %v1729 = vadd.f32 %v1676, %v1678
        %1730 = vadd.xlane.f32.xlu0 %v1729
        %v1731 = vpop.xlane.xlu0 %1730
        %v1732 = vadd.f32 %v1680, %v1682
        %1733 = vadd.xlane.f32.xlu0 %v1732
        %v1734 = vpop.xlane.xlu0 %1733
        %v1735 = vadd.f32 %v1684, %v1686
        %1736 = vadd.xlane.f32.xlu0 %v1735
        %v1737 = vpop.xlane.xlu0 %1736
        %v1738 = vadd.f32 %v1688, %v1690
        %1739 = vadd.xlane.f32.xlu0 %v1738
        %v1740 = vpop.xlane.xlu0 %1739
        %v1741 = vadd.f32 %v1692, %v1694
        %1742 = vadd.xlane.f32.xlu0 %v1741
        %v1743 = vpop.xlane.xlu0 %1742
        %v1744 = vadd.f32 %v1696, %v1698
        %1745 = vadd.xlane.f32.xlu0 %v1744
        %v1746 = vpop.xlane.xlu0 %1745
        %v1747 = vrcp.pop %v1701
        %v1748 = vrcp.pop %v1704
        %v1749 = vrcp.pop %v1707
        %v1750 = vrcp.pop %v1710
        %v1751 = vrcp.pop %v1713
        %v1752 = vrcp.pop %v1716
        %v1753 = vrcp.pop %v1719
        %v1754 = vrcp.pop %v1722
        %v1755 = vrcp.pop %v1725
        %v1756 = vrcp.pop %v1728
        %v1757 = vrcp.pop %v1731
        %v1758 = vrcp.pop %v1734
        %v1759 = vrcp.pop %v1737
        %v1760 = vrcp.pop %v1740
        %v1761 = vrcp.pop %v1743
        %v1762 = vrcp.pop %v1746
        %v1763 = vmul.f32 %v1636, %v1747
        %v1764 = vmul.f32 %v1638, %v1747
        %v1765 = vmul.f32 %v1640, %v1748
        %v1766 = vmul.f32 %v1642, %v1748
        %v1767 = vmul.f32 %v1644, %v1749
        %v1768 = vmul.f32 %v1646, %v1749
        %v1769 = vmul.f32 %v1648, %v1750
        %v1770 = vmul.f32 %v1650, %v1750
        %v1771 = vmul.f32 %v1652, %v1751
        %v1772 = vmul.f32 %v1654, %v1751
        %v1773 = vmul.f32 %v1656, %v1752
        %v1774 = vmul.f32 %v1658, %v1752
        %v1775 = vmul.f32 %v1660, %v1753
        %v1776 = vmul.f32 %v1662, %v1753
        %v1777 = vmul.f32 %v1664, %v1754
        %v1778 = vmul.f32 %v1666, %v1754
        %v1779 = vmul.f32 %v1668, %v1755
        %v1780 = vmul.f32 %v1670, %v1755
        %v1781 = vmul.f32 %v1672, %v1756
        %v1782 = vmul.f32 %v1674, %v1756
        %v1783 = vmul.f32 %v1676, %v1757
        %v1784 = vmul.f32 %v1678, %v1757
        %v1785 = vmul.f32 %v1680, %v1758
        %v1786 = vmul.f32 %v1682, %v1758
        %v1787 = vmul.f32 %v1684, %v1759
        %v1788 = vmul.f32 %v1686, %v1759
        %v1789 = vmul.f32 %v1688, %v1760
        %v1790 = vmul.f32 %v1690, %v1760
        %v1791 = vmul.f32 %v1692, %v1761
        %v1792 = vmul.f32 %v1694, %v1761
        %v1793 = vmul.f32 %v1696, %v1762
        %v1794 = vmul.f32 %v1698, %v1762
        %v1795 = vpack.c.bf16 %v1765, %v1763
        %v1796 = vpack.c.bf16 %v1766, %v1764
        %v1797 = vpack.c.bf16 %v1769, %v1767
        %v1798 = vpack.c.bf16 %v1770, %v1768
        %v1799 = vpack.c.bf16 %v1773, %v1771
        %v1800 = vpack.c.bf16 %v1774, %v1772
        %v1801 = vpack.c.bf16 %v1777, %v1775
        %v1802 = vpack.c.bf16 %v1778, %v1776
        %v1803 = vpack.c.bf16 %v1781, %v1779
        %v1804 = vpack.c.bf16 %v1782, %v1780
        %v1805 = vpack.c.bf16 %v1785, %v1783
        %v1806 = vpack.c.bf16 %v1786, %v1784
        %v1807 = vpack.c.bf16 %v1789, %v1787
        %v1808 = vpack.c.bf16 %v1790, %v1788
        %v1809 = vpack.c.bf16 %v1793, %v1791
        %v1810 = vpack.c.bf16 %v1794, %v1792
        %v1811 = vrot.slane %v396, 2
        %v1812 = vrot.slane %v397, 2
        %1815 = vmatpush.bf16.xpose.msra.mxu0 %v1809
        %1816 = vmatpush.bf16.xpose.msra.mxu0 %v1807
        %1817 = vmatpush.bf16.xpose.msra.mxu0 %v1805
        %1818 = vmatpush.bf16.xpose.msra.mxu0 %v1803
        %1819 = vmatpush.bf16.xpose.msra.mxu0 %v1801
        %1820 = vmatpush.bf16.xpose.msra.mxu0 %v1799
        %1821 = vmatpush.bf16.xpose.msra.mxu0 %v1797
        %1822 = vmatpush.bf16.xpose.msra.mxu0 %v1795
        %1823 = vmatmul.bf16.gmra.mxu0 %v1811
        %v1824 = vpop.f32.mrf.mxu0
        %v1825 = vadd.f32 0.0, %v1824
        %v1826 = vpop.f32.mrf.mxu0
        %1827 = vdwg.mxu0
        %1828 = vmatpush.bf16.xpose.msra.mxu0 %v1810
        %1829 = vmatpush.bf16.xpose.msra.mxu0 %v1808
        %1830 = vmatpush.bf16.xpose.msra.mxu0 %v1806
        %1831 = vmatpush.bf16.xpose.msra.mxu0 %v1804
        %1832 = vmatpush.bf16.xpose.msra.mxu0 %v1802
        %1833 = vmatpush.bf16.xpose.msra.mxu0 %v1800
        %1834 = vmatpush.bf16.xpose.msra.mxu0 %v1798
        %1835 = vmatpush.bf16.xpose.msra.mxu0 %v1796
        %1836 = vmatmul.bf16.gmra.mxu0 %v1812
        %v1837 = vpop.f32.mrf.mxu0
        %v1838 = vadd.f32 %v1825, %v1837
        %v1839 = vpop.f32.mrf.mxu0
        %1840 = vdwg.mxu0
        %1841 = vst [vmem:[#allocation2 + $0x4] sm:$0x3] %v1838
        %1842 = vrot.lane.b32.xlu0 %v380, 122
        %v1843 = vpop.permute.xlu0 %1842
        %1844 = vrot.lane.b32.xlu0 %v381, 122
        %v1845 = vpop.permute.xlu0 %1844
        %1846 = vrot.lane.b32.xlu0 %v382, 122
        %v1847 = vpop.permute.xlu0 %1846
        %1848 = vrot.lane.b32.xlu0 %v383, 122
        %v1849 = vpop.permute.xlu0 %1848
        %1850 = vrot.lane.b32.xlu0 %v384, 122
        %v1851 = vpop.permute.xlu0 %1850
        %1852 = vrot.lane.b32.xlu0 %v385, 122
        %v1853 = vpop.permute.xlu0 %1852
        %1854 = vrot.lane.b32.xlu0 %v386, 122
        %v1855 = vpop.permute.xlu0 %1854
        %1856 = vrot.lane.b32.xlu0 %v387, 122
        %v1857 = vpop.permute.xlu0 %1856
        %1858 = vrot.lane.b32.xlu0 %v388, 122
        %v1859 = vpop.permute.xlu0 %1858
        %1860 = vrot.lane.b32.xlu0 %v389, 122
        %v1861 = vpop.permute.xlu0 %1860
        %1862 = vrot.lane.b32.xlu0 %v390, 122
        %v1863 = vpop.permute.xlu0 %1862
        %1864 = vrot.lane.b32.xlu0 %v391, 122
        %v1865 = vpop.permute.xlu0 %1864
        %1866 = vrot.lane.b32.xlu0 %v392, 122
        %v1867 = vpop.permute.xlu0 %1866
        %1868 = vrot.lane.b32.xlu0 %v393, 122
        %v1869 = vpop.permute.xlu0 %1868
        %1870 = vrot.lane.b32.xlu0 %v394, 122
        %v1871 = vpop.permute.xlu0 %1870
        %1872 = vrot.lane.b32.xlu0 %v395, 122
        %v1873 = vpop.permute.xlu0 %1872
        %v1874 = vrot.slane %v345, 6
        %v1875 = vrot.slane %v359, 6
        %v1876 = vsel %vm398, %v1843, 0
        %v1878 = vsel %vm398, %v1845, 0
        %v1880 = vsel %vm398, %v1847, 0
        %v1882 = vsel %vm398, %v1849, 0
        %v1884 = vsel %vm398, %v1851, 0
        %v1886 = vsel %vm398, %v1853, 0
        %v1888 = vsel %vm398, %v1855, 0
        %v1890 = vsel %vm398, %v1857, 0
        %v1892 = vsel %vm398, %v1859, 0
        %v1894 = vsel %vm398, %v1861, 0
        %v1896 = vsel %vm398, %v1863, 0
        %v1898 = vsel %vm398, %v1865, 0
        %v1900 = vsel %vm398, %v1867, 0
        %v1902 = vsel %vm398, %v1869, 0
        %v1904 = vsel %vm398, %v1871, 0
        %v1906 = vsel %vm398, %v1873, 0
        %v1908 = vsel %vm309, %v1874, 0
        %v1910 = vsel %vm309, %v1875, 0
        %1912 = vmatpush.msra.mxu0 0.0
        %1913 = vmatpush.msra.mxu0 0.0
        %1914 = vmatpush.msra.mxu0 0.0
        %1915 = vmatpush.msra.mxu0 0.0
        %1916 = vmatpush.msra.mxu0 0.0
        %1917 = vmatpush.msra.mxu0 0.0
        %1918 = vmatpush.msra.mxu0 0.0
        %1919 = vmatpush.msra.mxu0 0.0
        %1920 = vmatpush.msra.mxu0 0.0
        %1921 = vmatpush.msra.mxu0 0.0
        %1922 = vmatpush.msra.mxu0 0.0
        %1923 = vmatpush.msra.mxu0 0.0
        %1924 = vmatpush.msra.mxu0 0.0
        %1925 = vmatpush.msra.mxu0 0.0
        %1926 = vmatpush.msra.mxu0 0.0
        %1927 = vmatpush.msra.mxu0 %v1908
        %1928 = vmatmul.f32.gmra.mxu0 %v1876
        %v1929 = vpop.f32.mrf.mxu0
        %v1930 = vadd.f32 0.0, %v1929
        %1931 = vmatmul.f32.gmra.mxu0 %v1878
        %v1932 = vpop.f32.mrf.mxu0
        %v1933 = vadd.f32 0.0, %v1932
        %1934 = vmatmul.f32.gmra.mxu0 %v1880
        %v1935 = vpop.f32.mrf.mxu0
        %v1936 = vadd.f32 0.0, %v1935
        %1937 = vmatmul.f32.gmra.mxu0 %v1882
        %v1938 = vpop.f32.mrf.mxu0
        %v1939 = vadd.f32 0.0, %v1938
        %1940 = vmatmul.f32.gmra.mxu0 %v1884
        %v1941 = vpop.f32.mrf.mxu0
        %v1942 = vadd.f32 0.0, %v1941
        %1943 = vmatmul.f32.gmra.mxu0 %v1886
        %v1944 = vpop.f32.mrf.mxu0
        %v1945 = vadd.f32 0.0, %v1944
        %1946 = vmatmul.f32.gmra.mxu0 %v1888
        %v1947 = vpop.f32.mrf.mxu0
        %v1948 = vadd.f32 0.0, %v1947
        %1949 = vmatmul.f32.gmra.mxu0 %v1890
        %v1950 = vpop.f32.mrf.mxu0
        %v1951 = vadd.f32 0.0, %v1950
        %1952 = vmatmul.f32.gmra.mxu0 %v1892
        %v1953 = vpop.f32.mrf.mxu0
        %v1954 = vadd.f32 0.0, %v1953
        %1955 = vmatmul.f32.gmra.mxu0 %v1894
        %v1956 = vpop.f32.mrf.mxu0
        %v1957 = vadd.f32 0.0, %v1956
        %1958 = vmatmul.f32.gmra.mxu0 %v1896
        %v1959 = vpop.f32.mrf.mxu0
        %v1960 = vadd.f32 0.0, %v1959
        %1961 = vmatmul.f32.gmra.mxu0 %v1898
        %v1962 = vpop.f32.mrf.mxu0
        %v1963 = vadd.f32 0.0, %v1962
        %1964 = vmatmul.f32.gmra.mxu0 %v1900
        %v1965 = vpop.f32.mrf.mxu0
        %v1966 = vadd.f32 0.0, %v1965
        %1967 = vmatmul.f32.gmra.mxu0 %v1902
        %v1968 = vpop.f32.mrf.mxu0
        %v1969 = vadd.f32 0.0, %v1968
        %1970 = vmatmul.f32.gmra.mxu0 %v1904
        %v1971 = vpop.f32.mrf.mxu0
        %v1972 = vadd.f32 0.0, %v1971
        %1973 = vmatmul.f32.gmra.mxu0 %v1906
        %v1974 = vpop.f32.mrf.mxu0
        %v1975 = vadd.f32 0.0, %v1974
        %1976 = vdwg.mxu0
        %1977 = vmatpush.msra.mxu0 0.0
        %1978 = vmatpush.msra.mxu0 0.0
        %1979 = vmatpush.msra.mxu0 0.0
        %1980 = vmatpush.msra.mxu0 0.0
        %1981 = vmatpush.msra.mxu0 0.0
        %1982 = vmatpush.msra.mxu0 0.0
        %1983 = vmatpush.msra.mxu0 0.0
        %1984 = vmatpush.msra.mxu0 0.0
        %1985 = vmatpush.msra.mxu0 0.0
        %1986 = vmatpush.msra.mxu0 0.0
        %1987 = vmatpush.msra.mxu0 0.0
        %1988 = vmatpush.msra.mxu0 0.0
        %1989 = vmatpush.msra.mxu0 0.0
        %1990 = vmatpush.msra.mxu0 0.0
        %1991 = vmatpush.msra.mxu0 0.0
        %1992 = vmatpush.msra.mxu0 %v1910
        %1993 = vmatmul.f32.gmra.mxu0 %v1876
        %v1994 = vpop.f32.mrf.mxu0
        %v1995 = vadd.f32 0.0, %v1994
        %1996 = vmatmul.f32.gmra.mxu0 %v1878
        %v1997 = vpop.f32.mrf.mxu0
        %v1998 = vadd.f32 0.0, %v1997
        %1999 = vmatmul.f32.gmra.mxu0 %v1880
        %v2000 = vpop.f32.mrf.mxu0
        %v2001 = vadd.f32 0.0, %v2000
        %2002 = vmatmul.f32.gmra.mxu0 %v1882
        %v2003 = vpop.f32.mrf.mxu0
        %v2004 = vadd.f32 0.0, %v2003
        %2005 = vmatmul.f32.gmra.mxu0 %v1884
        %v2006 = vpop.f32.mrf.mxu0
        %v2007 = vadd.f32 0.0, %v2006
        %2008 = vmatmul.f32.gmra.mxu0 %v1886
        %v2009 = vpop.f32.mrf.mxu0
        %v2010 = vadd.f32 0.0, %v2009
        %2011 = vmatmul.f32.gmra.mxu0 %v1888
        %v2012 = vpop.f32.mrf.mxu0
        %v2013 = vadd.f32 0.0, %v2012
        %2014 = vmatmul.f32.gmra.mxu0 %v1890
        %v2015 = vpop.f32.mrf.mxu0
        %v2016 = vadd.f32 0.0, %v2015
        %2017 = vmatmul.f32.gmra.mxu0 %v1892
        %v2018 = vpop.f32.mrf.mxu0
        %v2019 = vadd.f32 0.0, %v2018
        %2020 = vmatmul.f32.gmra.mxu0 %v1894
        %v2021 = vpop.f32.mrf.mxu0
        %v2022 = vadd.f32 0.0, %v2021
        %2023 = vmatmul.f32.gmra.mxu0 %v1896
        %v2024 = vpop.f32.mrf.mxu0
        %v2025 = vadd.f32 0.0, %v2024
        %2026 = vmatmul.f32.gmra.mxu0 %v1898
        %v2027 = vpop.f32.mrf.mxu0
        %v2028 = vadd.f32 0.0, %v2027
        %2029 = vmatmul.f32.gmra.mxu0 %v1900
        %v2030 = vpop.f32.mrf.mxu0
        %v2031 = vadd.f32 0.0, %v2030
        %2032 = vmatmul.f32.gmra.mxu0 %v1902
        %v2033 = vpop.f32.mrf.mxu0
        %v2034 = vadd.f32 0.0, %v2033
        %2035 = vmatmul.f32.gmra.mxu0 %v1904
        %v2036 = vpop.f32.mrf.mxu0
        %v2037 = vadd.f32 0.0, %v2036
        %2038 = vmatmul.f32.gmra.mxu0 %v1906
        %v2039 = vpop.f32.mrf.mxu0
        %v2040 = vadd.f32 0.0, %v2039
        %2041 = vdwg.mxu0
        %v2042 = vmax.f32 %v1930, %v1995
        %2043 = vmax.xlane.f32.xlu0 %v2042
        %v2044 = vpop.xlane.xlu0 %2043
        %v2045 = vmax.f32 %v1933, %v1998
        %2046 = vmax.xlane.f32.xlu0 %v2045
        %v2047 = vpop.xlane.xlu0 %2046
        %v2048 = vmax.f32 %v1936, %v2001
        %2049 = vmax.xlane.f32.xlu0 %v2048
        %v2050 = vpop.xlane.xlu0 %2049
        %v2051 = vmax.f32 %v1939, %v2004
        %2052 = vmax.xlane.f32.xlu0 %v2051
        %v2053 = vpop.xlane.xlu0 %2052
        %v2054 = vmax.f32 %v1942, %v2007
        %2055 = vmax.xlane.f32.xlu0 %v2054
        %v2056 = vpop.xlane.xlu0 %2055
        %v2057 = vmax.f32 %v1945, %v2010
        %2058 = vmax.xlane.f32.xlu0 %v2057
        %v2059 = vpop.xlane.xlu0 %2058
        %v2060 = vmax.f32 %v1948, %v2013
        %2061 = vmax.xlane.f32.xlu0 %v2060
        %v2062 = vpop.xlane.xlu0 %2061
        %v2063 = vmax.f32 %v1951, %v2016
        %2064 = vmax.xlane.f32.xlu0 %v2063
        %v2065 = vpop.xlane.xlu0 %2064
        %v2066 = vmax.f32 %v1954, %v2019
        %2067 = vmax.xlane.f32.xlu0 %v2066
        %v2068 = vpop.xlane.xlu0 %2067
        %v2069 = vmax.f32 %v1957, %v2022
        %2070 = vmax.xlane.f32.xlu0 %v2069
        %v2071 = vpop.xlane.xlu0 %2070
        %v2072 = vmax.f32 %v1960, %v2025
        %2073 = vmax.xlane.f32.xlu0 %v2072
        %v2074 = vpop.xlane.xlu0 %2073
        %v2075 = vmax.f32 %v1963, %v2028
        %2076 = vmax.xlane.f32.xlu0 %v2075
        %v2077 = vpop.xlane.xlu0 %2076
        %v2078 = vmax.f32 %v1966, %v2031
        %2079 = vmax.xlane.f32.xlu0 %v2078
        %v2080 = vpop.xlane.xlu0 %2079
        %v2081 = vmax.f32 %v1969, %v2034
        %2082 = vmax.xlane.f32.xlu0 %v2081
        %v2083 = vpop.xlane.xlu0 %2082
        %v2084 = vmax.f32 %v1972, %v2037
        %2085 = vmax.xlane.f32.xlu0 %v2084
        %v2086 = vpop.xlane.xlu0 %2085
        %v2087 = vmax.f32 %v1975, %v2040
        %2088 = vmax.xlane.f32.xlu0 %v2087
        %v2089 = vpop.xlane.xlu0 %2088
        %v2090 = vsub.f32 %v1930, %v2044
        %v2091 = vsub.f32 %v1995, %v2044
        %v2092 = vsub.f32 %v1933, %v2047
        %v2093 = vsub.f32 %v1998, %v2047
        %v2094 = vsub.f32 %v1936, %v2050
        %v2095 = vsub.f32 %v2001, %v2050
        %v2096 = vsub.f32 %v1939, %v2053
        %v2097 = vsub.f32 %v2004, %v2053
        %v2098 = vsub.f32 %v1942, %v2056
        %v2099 = vsub.f32 %v2007, %v2056
        %v2100 = vsub.f32 %v1945, %v2059
        %v2101 = vsub.f32 %v2010, %v2059
        %v2102 = vsub.f32 %v1948, %v2062
        %v2103 = vsub.f32 %v2013, %v2062
        %v2104 = vsub.f32 %v1951, %v2065
        %v2105 = vsub.f32 %v2016, %v2065
        %v2106 = vsub.f32 %v1954, %v2068
        %v2107 = vsub.f32 %v2019, %v2068
        %v2108 = vsub.f32 %v1957, %v2071
        %v2109 = vsub.f32 %v2022, %v2071
        %v2110 = vsub.f32 %v1960, %v2074
        %v2111 = vsub.f32 %v2025, %v2074
        %v2112 = vsub.f32 %v1963, %v2077
        %v2113 = vsub.f32 %v2028, %v2077
        %v2114 = vsub.f32 %v1966, %v2080
        %v2115 = vsub.f32 %v2031, %v2080
        %v2116 = vsub.f32 %v1969, %v2083
        %v2117 = vsub.f32 %v2034, %v2083
        %v2118 = vsub.f32 %v1972, %v2086
        %v2119 = vsub.f32 %v2037, %v2086
        %v2120 = vsub.f32 %v1975, %v2089
        %v2121 = vsub.f32 %v2040, %v2089
        %v2122 = vmul.f32 %v2090, 1.442695
        %v2123 = vpow.pop %v2122
        %v2124 = vmul.f32 %v2091, 1.442695
        %v2125 = vpow.pop %v2124
        %v2126 = vmul.f32 %v2092, 1.442695
        %v2127 = vpow.pop %v2126
        %v2128 = vmul.f32 %v2093, 1.442695
        %v2129 = vpow.pop %v2128
        %v2130 = vmul.f32 %v2094, 1.442695
        %v2131 = vpow.pop %v2130
        %v2132 = vmul.f32 %v2095, 1.442695
        %v2133 = vpow.pop %v2132
        %v2134 = vmul.f32 %v2096, 1.442695
        %v2135 = vpow.pop %v2134
        %v2136 = vmul.f32 %v2097, 1.442695
        %v2137 = vpow.pop %v2136
        %v2138 = vmul.f32 %v2098, 1.442695
        %v2139 = vpow.pop %v2138
        %v2140 = vmul.f32 %v2099, 1.442695
        %v2141 = vpow.pop %v2140
        %v2142 = vmul.f32 %v2100, 1.442695
        %v2143 = vpow.pop %v2142
        %v2144 = vmul.f32 %v2101, 1.442695
        %v2145 = vpow.pop %v2144
        %v2146 = vmul.f32 %v2102, 1.442695
        %v2147 = vpow.pop %v2146
        %v2148 = vmul.f32 %v2103, 1.442695
        %v2149 = vpow.pop %v2148
        %v2150 = vmul.f32 %v2104, 1.442695
        %v2151 = vpow.pop %v2150
        %v2152 = vmul.f32 %v2105, 1.442695
        %v2153 = vpow.pop %v2152
        %v2154 = vmul.f32 %v2106, 1.442695
        %v2155 = vpow.pop %v2154
        %v2156 = vmul.f32 %v2107, 1.442695
        %v2157 = vpow.pop %v2156
        %v2158 = vmul.f32 %v2108, 1.442695
        %v2159 = vpow.pop %v2158
        %v2160 = vmul.f32 %v2109, 1.442695
        %v2161 = vpow.pop %v2160
        %v2162 = vmul.f32 %v2110, 1.442695
        %v2163 = vpow.pop %v2162
        %v2164 = vmul.f32 %v2111, 1.442695
        %v2165 = vpow.pop %v2164
        %v2166 = vmul.f32 %v2112, 1.442695
        %v2167 = vpow.pop %v2166
        %v2168 = vmul.f32 %v2113, 1.442695
        %v2169 = vpow.pop %v2168
        %v2170 = vmul.f32 %v2114, 1.442695
        %v2171 = vpow.pop %v2170
        %v2172 = vmul.f32 %v2115, 1.442695
        %v2173 = vpow.pop %v2172
        %v2174 = vmul.f32 %v2116, 1.442695
        %v2175 = vpow.pop %v2174
        %v2176 = vmul.f32 %v2117, 1.442695
        %v2177 = vpow.pop %v2176
        %v2178 = vmul.f32 %v2118, 1.442695
        %v2179 = vpow.pop %v2178
        %v2180 = vmul.f32 %v2119, 1.442695
        %v2181 = vpow.pop %v2180
        %v2182 = vmul.f32 %v2120, 1.442695
        %v2183 = vpow.pop %v2182
        %v2184 = vmul.f32 %v2121, 1.442695
        %v2185 = vpow.pop %v2184
        %v2186 = vadd.f32 %v2123, %v2125
        %2187 = vadd.xlane.f32.xlu0 %v2186
        %v2188 = vpop.xlane.xlu0 %2187
        %v2189 = vadd.f32 %v2127, %v2129
        %2190 = vadd.xlane.f32.xlu0 %v2189
        %v2191 = vpop.xlane.xlu0 %2190
        %v2192 = vadd.f32 %v2131, %v2133
        %2193 = vadd.xlane.f32.xlu0 %v2192
        %v2194 = vpop.xlane.xlu0 %2193
        %v2195 = vadd.f32 %v2135, %v2137
        %2196 = vadd.xlane.f32.xlu0 %v2195
        %v2197 = vpop.xlane.xlu0 %2196
        %v2198 = vadd.f32 %v2139, %v2141
        %2199 = vadd.xlane.f32.xlu0 %v2198
        %v2200 = vpop.xlane.xlu0 %2199
        %v2201 = vadd.f32 %v2143, %v2145
        %2202 = vadd.xlane.f32.xlu0 %v2201
        %v2203 = vpop.xlane.xlu0 %2202
        %v2204 = vadd.f32 %v2147, %v2149
        %2205 = vadd.xlane.f32.xlu0 %v2204
        %v2206 = vpop.xlane.xlu0 %2205
        %v2207 = vadd.f32 %v2151, %v2153
        %2208 = vadd.xlane.f32.xlu0 %v2207
        %v2209 = vpop.xlane.xlu0 %2208
        %v2210 = vadd.f32 %v2155, %v2157
        %2211 = vadd.xlane.f32.xlu0 %v2210
        %v2212 = vpop.xlane.xlu0 %2211
        %v2213 = vadd.f32 %v2159, %v2161
        %2214 = vadd.xlane.f32.xlu0 %v2213
        %v2215 = vpop.xlane.xlu0 %2214
        %v2216 = vadd.f32 %v2163, %v2165
        %2217 = vadd.xlane.f32.xlu0 %v2216
        %v2218 = vpop.xlane.xlu0 %2217
        %v2219 = vadd.f32 %v2167, %v2169
        %2220 = vadd.xlane.f32.xlu0 %v2219
        %v2221 = vpop.xlane.xlu0 %2220
        %v2222 = vadd.f32 %v2171, %v2173
        %2223 = vadd.xlane.f32.xlu0 %v2222
        %v2224 = vpop.xlane.xlu0 %2223
        %v2225 = vadd.f32 %v2175, %v2177
        %2226 = vadd.xlane.f32.xlu0 %v2225
        %v2227 = vpop.xlane.xlu0 %2226
        %v2228 = vadd.f32 %v2179, %v2181
        %2229 = vadd.xlane.f32.xlu0 %v2228
        %v2230 = vpop.xlane.xlu0 %2229
        %v2231 = vadd.f32 %v2183, %v2185
        %2232 = vadd.xlane.f32.xlu0 %v2231
        %v2233 = vpop.xlane.xlu0 %2232
        %v2234 = vrcp.pop %v2188
        %v2235 = vrcp.pop %v2191
        %v2236 = vrcp.pop %v2194
        %v2237 = vrcp.pop %v2197
        %v2238 = vrcp.pop %v2200
        %v2239 = vrcp.pop %v2203
        %v2240 = vrcp.pop %v2206
        %v2241 = vrcp.pop %v2209
        %v2242 = vrcp.pop %v2212
        %v2243 = vrcp.pop %v2215
        %v2244 = vrcp.pop %v2218
        %v2245 = vrcp.pop %v2221
        %v2246 = vrcp.pop %v2224
        %v2247 = vrcp.pop %v2227
        %v2248 = vrcp.pop %v2230
        %v2249 = vrcp.pop %v2233
        %v2250 = vmul.f32 %v2123, %v2234
        %v2251 = vmul.f32 %v2125, %v2234
        %v2252 = vmul.f32 %v2127, %v2235
        %v2253 = vmul.f32 %v2129, %v2235
        %v2254 = vmul.f32 %v2131, %v2236
        %v2255 = vmul.f32 %v2133, %v2236
        %v2256 = vmul.f32 %v2135, %v2237
        %v2257 = vmul.f32 %v2137, %v2237
        %v2258 = vmul.f32 %v2139, %v2238
        %v2259 = vmul.f32 %v2141, %v2238
        %v2260 = vmul.f32 %v2143, %v2239
        %v2261 = vmul.f32 %v2145, %v2239
        %v2262 = vmul.f32 %v2147, %v2240
        %v2263 = vmul.f32 %v2149, %v2240
        %v2264 = vmul.f32 %v2151, %v2241
        %v2265 = vmul.f32 %v2153, %v2241
        %v2266 = vmul.f32 %v2155, %v2242
        %v2267 = vmul.f32 %v2157, %v2242
        %v2268 = vmul.f32 %v2159, %v2243
        %v2269 = vmul.f32 %v2161, %v2243
        %v2270 = vmul.f32 %v2163, %v2244
        %v2271 = vmul.f32 %v2165, %v2244
        %v2272 = vmul.f32 %v2167, %v2245
        %v2273 = vmul.f32 %v2169, %v2245
        %v2274 = vmul.f32 %v2171, %v2246
        %v2275 = vmul.f32 %v2173, %v2246
        %v2276 = vmul.f32 %v2175, %v2247
        %v2277 = vmul.f32 %v2177, %v2247
        %v2278 = vmul.f32 %v2179, %v2248
        %v2279 = vmul.f32 %v2181, %v2248
        %v2280 = vmul.f32 %v2183, %v2249
        %v2281 = vmul.f32 %v2185, %v2249
        %v2282 = vpack.c.bf16 %v2252, %v2250
        %v2283 = vpack.c.bf16 %v2253, %v2251
        %v2284 = vpack.c.bf16 %v2256, %v2254
        %v2285 = vpack.c.bf16 %v2257, %v2255
        %v2286 = vpack.c.bf16 %v2260, %v2258
        %v2287 = vpack.c.bf16 %v2261, %v2259
        %v2288 = vpack.c.bf16 %v2264, %v2262
        %v2289 = vpack.c.bf16 %v2265, %v2263
        %v2290 = vpack.c.bf16 %v2268, %v2266
        %v2291 = vpack.c.bf16 %v2269, %v2267
        %v2292 = vpack.c.bf16 %v2272, %v2270
        %v2293 = vpack.c.bf16 %v2273, %v2271
        %v2294 = vpack.c.bf16 %v2276, %v2274
        %v2295 = vpack.c.bf16 %v2277, %v2275
        %v2296 = vpack.c.bf16 %v2280, %v2278
        %v2297 = vpack.c.bf16 %v2281, %v2279
        %v2298 = vrot.slane %v396, 3
        %v2299 = vrot.slane %v397, 3
        %2302 = vmatpush.bf16.xpose.msra.mxu0 %v2296
        %2303 = vmatpush.bf16.xpose.msra.mxu0 %v2294
        %2304 = vmatpush.bf16.xpose.msra.mxu0 %v2292
        %2305 = vmatpush.bf16.xpose.msra.mxu0 %v2290
        %2306 = vmatpush.bf16.xpose.msra.mxu0 %v2288
        %2307 = vmatpush.bf16.xpose.msra.mxu0 %v2286
        %2308 = vmatpush.bf16.xpose.msra.mxu0 %v2284
        %2309 = vmatpush.bf16.xpose.msra.mxu0 %v2282
        %2310 = vmatmul.bf16.gmra.mxu0 %v2298
        %v2311 = vpop.f32.mrf.mxu0
        %v2312 = vadd.f32 0.0, %v2311
        %v2313 = vpop.f32.mrf.mxu0
        %2314 = vdwg.mxu0
        %2315 = vmatpush.bf16.xpose.msra.mxu0 %v2297
        %2316 = vmatpush.bf16.xpose.msra.mxu0 %v2295
        %2317 = vmatpush.bf16.xpose.msra.mxu0 %v2293
        %2318 = vmatpush.bf16.xpose.msra.mxu0 %v2291
        %2319 = vmatpush.bf16.xpose.msra.mxu0 %v2289
        %2320 = vmatpush.bf16.xpose.msra.mxu0 %v2287
        %2321 = vmatpush.bf16.xpose.msra.mxu0 %v2285
        %2322 = vmatpush.bf16.xpose.msra.mxu0 %v2283
        %2323 = vmatmul.bf16.gmra.mxu0 %v2299
        %v2324 = vpop.f32.mrf.mxu0
        %v2325 = vadd.f32 %v2312, %v2324
        %v2326 = vpop.f32.mrf.mxu0
        %2327 = vdwg.mxu0
        %2328 = vst [vmem:[#allocation2 + $0x6] sm:$0x3] %v2325
        %v2329 = vld [vmem:[#allocation2] sm:$0xff]
        %v2330 = vpack.c.bf16 %v2329, %v2329
        %v2331 = vld [vmem:[%s3] sm:$0xf]
        %v2332 = vpack.c.bf16 %v2331, %v2331
        %v2333 = vld [vmem:[%s4] sm:$0xf]
        %2335 = vset.pattern.permute.xlu0 0
        %2336 = vperm.xlu0 %2335, %v2333
        %v2337 = vpop.permute.xlu0 %2336
        %vm2339 = vcmask 64512
        %v2341 = vsel %vm2339, %v2332, 0
        %vm2343 = vcmask 1043456
        %v2345 = vsel %vm2343, %v2330, 0
        %2347 = vmatpush.bf16.msra.mxu0 0
        %2348 = vmatpush.bf16.msra.mxu0 0
        %2349 = vmatpush.bf16.msra.mxu0 0
        %2350 = vmatpush.bf16.msra.mxu0 0
        %2351 = vmatpush.bf16.msra.mxu0 0
        %2352 = vmatpush.bf16.msra.mxu0 0
        %2353 = vmatpush.bf16.msra.mxu0 0
        %2354 = vmatpush.bf16.msra.mxu0 %v2345
        %2355 = vmatmul.bf16.gmra.mxu0 %v2341
        %v2356 = vpop.f32.mrf.mxu0
        %v2357 = vadd.f32 %v2337, %v2356
        %v2358 = vpop.f32.mrf.mxu0
        %2359 = vdwg.mxu0
        %2360 = vst [vmem:[%s279] sm:$0xf] %v2357
        %s2361 = sand.u32 %s161, 1
        %s2362 = scalar_lea.sflag [#allocation5], %s2361
        %s2363 = sand.u32 %s161, 1
        %s2364 = smul.addr %s2363, 4
        %s2365 = scalar_lea.vmem [#allocation6], %s2364
        // Predicated region
        $region45: #{tpu_custom_call.1} parent=39 // pred_check
          %p2366 = pneg %p171
        $region46: #{tpu_custom_call.1} parent=39 // pred_check_branch
          %2368 = sbr.rel (%p2366) target = $region48
        $region47: #{tpu_custom_call.1} parent=39 // pred_region
          %2370 = vsyncadd %s2362, 0
          %s2371 = smul.addr %s26, 2
          %s2372 = sadd.s32 %s27, %s2371
          %s2373 = smul.addr %s2372, 4
          %s2374 = scalar_lea.hbm %s5, %s2373
          %s2376 = sshll.u32 %s2365, 4
          %s2377 = int_to_ptr.vmem [resolvable:$true] %s2376
          %s2378 = sshll.u32 %s2374, 4
          %s2379 = int_to_ptr.hbm [resolvable:$true] %s2378
          %2381 = dma.vmem_to_hbm [thread:$0]  %s2377, 64, %s2379, %s2362
        $region48: #{tpu_custom_call.1} parent=39 // pred_fallthru
          _
      $region40: #{tpu_custom_call.1} parent=5 // pred_fallthru
        _
      %p2382 = scmp.le.s32.totalorder 2, %s17
      // Predicated region
      $region49: #{tpu_custom_call.1} parent=5 // pred_check
        %p2383 = pneg %p2382
      $region50: #{tpu_custom_call.1} parent=5 // pred_check_branch
        %2385 = sbr.rel (%p2383) target = $region52
      $region51: #{tpu_custom_call.1} parent=5 // pred_region
        %s2386 = ssub.s32 %s17, 2
        // Predicated region
        $region53: #{tpu_custom_call.1} parent=51 // pred_check
          %p2387 = pneg %p177
        $region54: #{tpu_custom_call.1} parent=51 // pred_check_branch
          %2389 = sbr.rel (%p2387) target = $region56
        $region55: #{tpu_custom_call.1} parent=51 // pred_region
          %s2390 = sand.u32 %s162, 1
          %s2391 = scalar_lea.sflag [#allocation5], %s2390
          %s2392 = sand.u32 %s162, 1
          %s2393 = smul.addr %s2392, 4
          %s2394 = scalar_lea.vmem [#allocation6], %s2393
          %2396 = dma.done %s2391, 64
        $region56: #{tpu_custom_call.1} parent=51 // pred_fallthru
          _
      $region52: #{tpu_custom_call.1} parent=5 // pred_fallthru
        _
    $region6: #{tpu_custom_call.1} parent=1 // loop_footer
      %s21 = sadd.s32 1, %s17
    $region7: #{tpu_custom_call.1} parent=1 // loop_footer_branch
      %16 = sbr.rel target = $region3
    $region8: #{tpu_custom_call.1} parent=1 // loop_exit
      _
    %2397 = vsyncpa [#allocation4], 1
    %s2398 = scalar_lea.sflag [#allocation4], 1
    %2399 = vsyncpa %s2398, 1
    %2400 = vsyncpa [#allocation5], 1
    %s2401 = scalar_lea.sflag [#allocation5], 1
    %2402 = vsyncpa %s2401, 1

</llo_original>
